<compile_context>
chip_gen: v6e
topology: v6e:2x2x1
jax: 0.10.0
libtpu: 0.0.40
codegen_flags: <defaults>
</compile_context>

<pallas_src>
import functools
import math

import jax
import jax.numpy as jnp
from jax import lax
from jax.experimental import pallas as pl
from jax.experimental.pallas import tpu as pltpu


def _round_up(v, m):
    return ((v + m - 1) // m) * m


# ----------------------------------------------------------------------------
# Pallas kernel: the x/u-dependent hot path (one row block per grid step)
# ----------------------------------------------------------------------------
def composite_forward_kernel(xcol_ref, xrow_ref, zrow_ref, zcol_ref, caug_ref,
                             means_ref, yc_ref, ac_ref, bc_ref,
                             *, os_a, inv_a, os_b, inv_b, jit, shared_ls):
    tm = xcol_ref.shape[0]
    n = xrow_ref.shape[1]             # padded N (all columns)
    mk = zrow_ref.shape[1]            # 2M + 2 (two extra "mean" lanes)
    m2 = mk - 2

    xcol = xcol_ref[...]              # (TM, 3) cols: x0, x1, u     (this row block)
    xrow = xrow_ref[...]              # (3, N)  rows: x0, x1, u     (all columns)
    zrow = zrow_ref[...]              # (6, MK) rows: z0, z1, os, inv, mask_a, a_beta
    zcol = zcol_ref[...]              # (MK, 4) cols: z0, z1, os, inv
    caug = caug_ref[...]              # (MK, MK) blockdiag(C_a, C_b) + mean columns

    x0c = xcol[:, 0:1]                # (TM, 1)
    x1c = xcol[:, 1:2]
    u_col = xcol[:, 2:3]
    x0r = xrow[0:1, :]                # (1, N)
    x1r = xrow[1:2, :]
    u_row = xrow[2:3, :]
    z0r = zrow[0:1, :]                # (1, MK)
    z1r = zrow[1:2, :]
    os_r = zrow[2:3, :]               # combined per-lane outputscale (0 on mean lanes)
    inv_r = zrow[3:4, :]              # combined per-lane 0.5/ls^2
    mask_a_r = zrow[4:5, :]           # 1 on alpha lanes only
    a_beta_r = zrow[5:6, :]           # whitened beta mean vector on beta lanes
    z0c = zcol[:, 0:1]                # (MK, 1)
    z1c = zcol[:, 1:2]
    os_c = zcol[:, 2:3]
    inv_c = zcol[:, 3:4]

    # --- K(x_blk, Z) lane-packed for both heads: VPU broadcasts + EUP exp ----
    d_xz = (x0c - z0r) ** 2 + (x1c - z1r) ** 2                   # (TM, MK)
    k_blk = os_r * jnp.exp(-d_xz * inv_r)                        # mean lanes = 0

    # --- K(Z, x_all) in native (K, N) orientation (shared RHS, no transposes)
    d_zx = (z0c - x0r) ** 2 + (z1c - x1r) ** 2                   # (MK, N)
    k_full = os_c * jnp.exp(-d_zx * inv_c)                       # mean rows = 0

    # --- one MXU pass: kc = K_blk @ [blockdiag(C_a,C_b) | a_alpha | a_beta] --
    kc = jnp.dot(k_blk, caug, preferred_element_type=jnp.float32)   # (TM, MK)
    a_mean_col = kc[:, m2:m2 + 1]                                # (TM, 1) alpha mean
    lb_mean_col = kc[:, m2 + 1:m2 + 2]                           # (TM, 1) log-beta mean

    # full-column log-beta mean row (b_cov columns need it for ALL N)
    lb_mean_row = jnp.dot(a_beta_r, k_full,
                          preferred_element_type=jnp.float32)    # (1, N)

    # --- covariance corrections K_xZ C K_Zx: mask kc per head, share K_full --
    kc_a = mask_a_r * kc                                         # alpha lanes only
    kc_b = kc - kc_a             # beta lanes (+ mean lanes, killed by zero K_full rows)
    corr_a = jnp.dot(kc_a, k_full, preferred_element_type=jnp.float32)  # (TM, N)
    corr_b = jnp.dot(kc_b, k_full, preferred_element_type=jnp.float32)  # (TM, N)

    # --- K(x_blk, x_all) per head; jitter only on the global diagonal --------
    d_xx = (x0c - x0r) ** 2 + (x1c - x1r) ** 2                   # (TM, N)
    r0 = pl.program_id(0) * tm
    ri = r0 + lax.broadcasted_iota(jnp.int32, (tm, 1), 0)        # global row ids
    ci = lax.broadcasted_iota(jnp.int32, (1, n), 1)              # global col ids
    jit_eye = jnp.where(ri == ci, jit, 0.0)
    if shared_ls:
        e_xx = jnp.exp(-d_xx * inv_a)                            # one exp, two scales
        k_xx_a = os_a * e_xx + jit_eye
        k_xx_b = os_b * e_xx + jit_eye
    else:
        k_xx_a = os_a * jnp.exp(-d_xx * inv_a) + jit_eye
        k_xx_b = os_b * jnp.exp(-d_xx * inv_b) + jit_eye

    a_cov = k_xx_a + corr_a
    lb_cov = k_xx_b + corr_b

    # --- squared_gaussian(log_beta): mean = 1 + 0.5 mu^2, cov = outer(mu,mu)*Sigma
    b_mean_col = 1.0 + 0.5 * lb_mean_col * lb_mean_col           # (TM, 1)
    b_cov = (lb_mean_col * lb_mean_row) * lb_cov                 # VPU broadcast

    # --- composite distribution ----------------------------------------------
    y_mean_col = a_mean_col + b_mean_col * u_col                 # (TM, 1)
    y_cov = a_cov + (u_col * u_row) * b_cov                      # VPU broadcast

    yc_ref[...] = y_cov
    ac_ref[...] = a_cov
    bc_ref[...] = b_cov
    means_ref[...] = jnp.concatenate(
        [y_mean_col, a_mean_col, b_mean_col, jnp.zeros((tm, 5), jnp.float32)],
        axis=1)                                                  # (TM, 8) slab


# ----------------------------------------------------------------------------
# Wrapper: host-side packing (cheap layout plumbing) + pallas_call with a grid
# ----------------------------------------------------------------------------
def composite_forward(x, u, z, a_alpha, C_alpha, a_beta, C_beta, hypers,
                      *, tm=256, vmem_limit_bytes=None):
    os_a, ls_a, os_b, ls_b, jitter = [float(h) for h in hypers]
    inv_a = 0.5 / (ls_a * ls_a)
    inv_b = 0.5 / (ls_b * ls_b)
    shared_ls = (inv_a == inv_b)

    x = jnp.asarray(x, jnp.float32)
    u = jnp.asarray(u, jnp.float32)
    z = jnp.asarray(z, jnp.float32)
    a_alpha = jnp.asarray(a_alpha, jnp.float32)
    a_beta = jnp.asarray(a_beta, jnp.float32)
    C_alpha = jnp.asarray(C_alpha, jnp.float32)
    C_beta = jnp.asarray(C_beta, jnp.float32)

    n = x.shape[0]
    m = z.shape[0]
    m2 = 2 * m
    mk = m2 + 2                       # + alpha-mean and log-beta-mean lanes

    # --- row-block tiling: lane axis padded to 128 and divisible by TM -------
    n_pad = _round_up(max(n, 8), 128)
    tm = max(8, min(int(tm), n_pad))
    tm = _round_up(tm, 8)
    n_pad = _round_up(n_pad, tm)
    grid = (n_pad // tm,)

    # --- host-side packing ----------------------------------------------------
    xp = jnp.zeros((n_pad, 2), jnp.float32).at[:n, :].set(x)
    up = jnp.zeros((n_pad,), jnp.float32).at[:n].set(u)
    xcol = jnp.concatenate([xp, up[:, None]], axis=1)                 # (Npad, 3)
    xrow = xcol.T                                                     # (3, Npad)

    lane = jnp.arange(mk)
    mask_a = (lane < m).astype(jnp.float32)
    mask_b = ((lane >= m) & (lane < m2)).astype(jnp.float32)
    zt = z.T                                                          # (2, M)
    z_ext = jnp.zeros((2, mk), jnp.float32).at[:, :m].set(zt).at[:, m:m2].set(zt)
    os_row = os_a * mask_a + os_b * mask_b
    inv_row = inv_a * mask_a + inv_b * mask_b
    a_beta_row = jnp.zeros((mk,), jnp.float32).at[m:m2].set(a_beta[:, 0])
    zrow = jnp.concatenate(
        [z_ext, os_row[None], inv_row[None], mask_a[None], a_beta_row[None]],
        axis=0)                                                       # (6, MK)
    zcol = jnp.concatenate([z_ext.T, os_row[:, None], inv_row[:, None]],
                           axis=1)                                    # (MK, 4)

    # C_aug = [blockdiag(C_a, C_b) | a_alpha | a_beta]  (mean columns ride the kc dot)
    caug = jnp.zeros((mk, mk), jnp.float32)
    caug = caug.at[:m, :m].set(C_alpha).at[m:m2, m:m2].set(C_beta)
    caug = caug.at[:m, m2].set(a_alpha[:, 0]).at[m:m2, m2 + 1].set(a_beta[:, 0])

    if vmem_limit_bytes is None:
        # ~a dozen (TM, Npad) f32 intermediates + double-buffered covariance outputs.
        vmem_limit_bytes = min(max(20 * tm * n_pad * 4 + (2 << 20), 32 << 20),
                               100 << 20)

    grid_spec = pltpu.PrefetchScalarGridSpec(
        num_scalar_prefetch=0,
        grid=grid,
        in_specs=[
            pl.BlockSpec((tm, 3), lambda i: (i, 0)),        # block's x/u columns
            pl.BlockSpec((3, n_pad), lambda i: (0, 0)),     # x/u rows (all columns)
            pl.BlockSpec((6, mk), lambda i: (0, 0)),        # z rows + per-lane scales
            pl.BlockSpec((mk, 4), lambda i: (0, 0)),        # z cols + per-row scales
            pl.BlockSpec((mk, mk), lambda i: (0, 0)),       # [C | a_alpha | a_beta]
        ],
        out_specs=[
            pl.BlockSpec((tm, 8), lambda i: (i, 0)),        # mean slab (y/alpha/beta)
            pl.BlockSpec((tm, n_pad), lambda i: (i, 0)),    # y covar rows
            pl.BlockSpec((tm, n_pad), lambda i: (i, 0)),    # alpha covar rows
            pl.BlockSpec((tm, n_pad), lambda i: (i, 0)),    # beta covar rows
        ],
    )
    kernel = functools.partial(
        composite_forward_kernel, os_a=os_a, inv_a=inv_a, os_b=os_b, inv_b=inv_b,
        jit=jitter, shared_ls=shared_ls)
    out_shapes = (
        jax.ShapeDtypeStruct((n_pad, 8), jnp.float32),
        jax.ShapeDtypeStruct((n_pad, n_pad), jnp.float32),
        jax.ShapeDtypeStruct((n_pad, n_pad), jnp.float32),
        jax.ShapeDtypeStruct((n_pad, n_pad), jnp.float32),
    )
    means, yc, ac, bc = pl.pallas_call(
        kernel,
        out_shape=out_shapes,
        grid_spec=grid_spec,
        compiler_params=pltpu.CompilerParams(
            dimension_semantics=("parallel",),
            vmem_limit_bytes=int(vmem_limit_bytes)),
    )(xcol, xrow, zrow, zcol, caug)

    # TODO(synk): gpytorch returns MultivariateNormal distribution objects;
    # here each distribution is represented by its (mean, covariance) pair.
    return ((means[:n, 0], yc[:n, :n]),
            (means[:n, 1], ac[:n, :n]),
            (means[:n, 2], bc[:n, :n]))


# ----------------------------------------------------------------------------
# Parameter setup (plain JAX glue: data-independent precompute)
# ----------------------------------------------------------------------------
def rbf_kernel(a, b, outputscale, lengthscale):
    d = jnp.sum((a[:, None, :] - b[None, :, :]) ** 2, axis=-1)
    return outputscale * jnp.exp(-0.5 * d / (lengthscale ** 2))


def make_gp_params(key, z, outputscale, lengthscale, jitter):
    """Deterministic synthetic variational parameters + whitened precomputes."""
    m = z.shape[0]
    k1, k2 = jax.random.split(key)
    var_mean = 0.3 * jax.random.normal(k1, (m,), jnp.float32)
    raw = 0.05 * jax.random.normal(k2, (m, m), jnp.float32)
    chol_s = jnp.tril(raw, -1) + jnp.eye(m, dtype=jnp.float32) * (
        1.0 + 0.05 * jnp.abs(jnp.diag(raw)))
    S = chol_s @ chol_s.T                                           # variational covar

    k_zz = rbf_kernel(z, z, outputscale, lengthscale) + jitter * jnp.eye(m)
    l_zz = jnp.linalg.cholesky(k_zz)
    l_inv = jax.scipy.linalg.solve_triangular(l_zz, jnp.eye(m), lower=True)

    a_vec = (l_inv.T @ var_mean).reshape(m, 1).astype(jnp.float32)      # L^{-T} m
    C = (l_inv.T @ (S - jnp.eye(m)) @ l_inv).astype(jnp.float32)        # L^{-T}(S-I)L^{-1}
    return a_vec, C


# ----------------------------------------------------------------------------
# Pure-JAX reference of the same math (for verification)
# ----------------------------------------------------------------------------
def reference_forward(x, u, z, a_alpha, C_alpha, a_beta, C_beta, hypers):
    os_a, ls_a, os_b, ls_b, jitter = hypers
    n = x.shape[0]

    def post(os, ls, a_vec, C):
        kxz = rbf_kernel(x, z, os, ls)
        kxx = rbf_kernel(x, x, os, ls) + jitter * jnp.eye(n)
        mean = kxz @ a_vec[:, 0]
        cov = kxx + kxz @ C @ kxz.T
        return mean, cov

    a_mean, a_cov = post(os_a, ls_a, a_alpha, C_alpha)
    lb_mean, lb_cov = post(os_b, ls_b, a_beta, C_beta)
    b_mean = 1.0 + 0.5 * lb_mean ** 2
    b_cov = jnp.outer(lb_mean, lb_mean) * lb_cov
    y_mean = a_mean + b_mean * u
    y_cov = a_cov + u[None, :] * b_cov * u[:, None]
    return (y_mean, y_cov), (a_mean, a_cov), (b_mean, b_cov)


# ----------------------------------------------------------------------------
if __name__ == "__main__":
    key = jax.random.PRNGKey(0)
    kx, ku, ka, kb = jax.random.split(key, 4)

    N = 16                                                # data points
    train_x = jax.random.uniform(kx, (N, 2), jnp.float32, minval=-1.0, maxval=1.0)
    train_u = jax.random.normal(ku, (N,), jnp.float32)

    # 5x5 inducing-point grid over the range of train_x (as in __init__)
    l = 5
    x_min, x_max = train_x[:, 0].min(), train_x[:, 0].max()
    y_min, y_max = train_x[:, 1].min(), train_x[:, 1].max()
    gx, gy = jnp.meshgrid(jnp.linspace(x_min, x_max, l),
                          jnp.linspace(y_min, y_max, l), indexing="ij")
    Z = jnp.stack([gx.ravel(), gy.ravel()], axis=-1).astype(jnp.float32)   # (25, 2)

    softplus0 = float(math.log(2.0))    # gpytorch default raw hyperparameter = 0
    os_a = ls_a = softplus0
    os_b = ls_b = softplus0
    jitter = 1e-6
    hypers = (os_a, ls_a, os_b, ls_b, jitter)

    a_alpha, C_alpha = make_gp_params(ka, Z, os_a, ls_a, jitter)
    a_beta, C_beta = make_gp_params(kb, Z, os_b, ls_b, jitter)

    out = composite_forward(train_x, train_u, Z,
                            a_alpha, C_alpha, a_beta, C_beta, hypers)
    out = jax.block_until_ready(out)
    (y_mean, y_cov), (a_mean, a_cov), (b_mean, b_cov) = out

    ref = reference_forward(train_x, train_u, Z,
                            a_alpha, C_alpha, a_beta, C_beta, hypers)
    (ry_mean, ry_cov), (ra_mean, ra_cov), (rb_mean, rb_cov) = ref

    for got, want in [(y_mean, ry_mean), (y_cov, ry_cov),
                      (a_mean, ra_mean), (a_cov, ra_cov),
                      (b_mean, rb_mean), (b_cov, rb_cov)]:
        assert got.shape == want.shape
        assert jnp.allclose(got, want, rtol=5e-3, atol=5e-3), (
            float(jnp.max(jnp.abs(got - want))))

    print("KERNEL_OK")
</pallas_src>

<mosaic_0001>
module attributes {stable_mosaic.version = 11 : i64} {
  func.func @composite_forward_kernel(%arg0: i32, %arg1: memref<128x3xf32, #tpu.memory_space<vmem>>, %arg2: memref<3x128xf32, #tpu.memory_space<vmem>>, %arg3: memref<6x52xf32, #tpu.memory_space<vmem>>, %arg4: memref<52x4xf32, #tpu.memory_space<vmem>>, %arg5: memref<52x52xf32, #tpu.memory_space<vmem>>, %arg6: memref<128x8xf32, #tpu.memory_space<vmem>>, %arg7: memref<128x128xf32, #tpu.memory_space<vmem>>, %arg8: memref<128x128xf32, #tpu.memory_space<vmem>>, %arg9: memref<128x128xf32, #tpu.memory_space<vmem>>) attributes {dimension_semantics = [#tpu.dimension_semantics<parallel>], iteration_bounds = array<i64: 1>, scalar_prefetch = 0 : i64, scratch_operands = 0 : i64, tpu.core_type = #tpu.core_type<tc>, window_params = [{transform_indices = @transform_0, window_bounds = array<i64: 128, 3>}, {pipeline_mode = #tpu.pipeline_mode<synchronous>, transform_indices = @transform_1, window_bounds = array<i64: 3, 128>}, {pipeline_mode = #tpu.pipeline_mode<synchronous>, transform_indices = @transform_2, window_bounds = array<i64: 6, 52>}, {pipeline_mode = #tpu.pipeline_mode<synchronous>, transform_indices = @transform_3, window_bounds = array<i64: 52, 4>}, {pipeline_mode = #tpu.pipeline_mode<synchronous>, transform_indices = @transform_4, window_bounds = array<i64: 52, 52>}, {transform_indices = @transform_5, window_bounds = array<i64: 128, 8>}, {transform_indices = @transform_6, window_bounds = array<i64: 128, 128>}, {transform_indices = @transform_7, window_bounds = array<i64: 128, 128>}, {transform_indices = @transform_8, window_bounds = array<i64: 128, 128>}]} {
    %c0 = arith.constant 0 : index
    %c0_0 = arith.constant 0 : index
    %0 = vector.load %arg1[%c0, %c0_0] : memref<128x3xf32, #tpu.memory_space<vmem>>, vector<128x3xf32>
    %c0_1 = arith.constant 0 : index
    %c0_2 = arith.constant 0 : index
    %1 = vector.load %arg2[%c0_1, %c0_2] : memref<3x128xf32, #tpu.memory_space<vmem>>, vector<3x128xf32>
    %c0_3 = arith.constant 0 : index
    %c0_4 = arith.constant 0 : index
    %2 = vector.load %arg3[%c0_3, %c0_4] : memref<6x52xf32, #tpu.memory_space<vmem>>, vector<6x52xf32>
    %c0_5 = arith.constant 0 : index
    %c0_6 = arith.constant 0 : index
    %3 = vector.load %arg4[%c0_5, %c0_6] : memref<52x4xf32, #tpu.memory_space<vmem>>, vector<52x4xf32>
    %c0_7 = arith.constant 0 : index
    %c0_8 = arith.constant 0 : index
    %4 = vector.load %arg5[%c0_7, %c0_8] : memref<52x52xf32, #tpu.memory_space<vmem>>, vector<52x52xf32>
    %5 = vector.extract_strided_slice %0 {offsets = [0, 0], sizes = [128, 1], strides = [1, 1]} : vector<128x3xf32> to vector<128x1xf32>
    %6 = vector.extract_strided_slice %0 {offsets = [0, 1], sizes = [128, 1], strides = [1, 1]} : vector<128x3xf32> to vector<128x1xf32>
    %7 = vector.extract_strided_slice %0 {offsets = [0, 2], sizes = [128, 1], strides = [1, 1]} : vector<128x3xf32> to vector<128x1xf32>
    %8 = vector.extract_strided_slice %1 {offsets = [0, 0], sizes = [1, 128], strides = [1, 1]} : vector<3x128xf32> to vector<1x128xf32>
    %9 = vector.extract_strided_slice %1 {offsets = [1, 0], sizes = [1, 128], strides = [1, 1]} : vector<3x128xf32> to vector<1x128xf32>
    %10 = vector.extract_strided_slice %1 {offsets = [2, 0], sizes = [1, 128], strides = [1, 1]} : vector<3x128xf32> to vector<1x128xf32>
    %11 = vector.extract_strided_slice %2 {offsets = [0, 0], sizes = [1, 52], strides = [1, 1]} : vector<6x52xf32> to vector<1x52xf32>
    %12 = vector.extract_strided_slice %2 {offsets = [1, 0], sizes = [1, 52], strides = [1, 1]} : vector<6x52xf32> to vector<1x52xf32>
    %13 = vector.extract_strided_slice %2 {offsets = [2, 0], sizes = [1, 52], strides = [1, 1]} : vector<6x52xf32> to vector<1x52xf32>
    %14 = vector.extract_strided_slice %2 {offsets = [3, 0], sizes = [1, 52], strides = [1, 1]} : vector<6x52xf32> to vector<1x52xf32>
    %15 = vector.extract_strided_slice %2 {offsets = [4, 0], sizes = [1, 52], strides = [1, 1]} : vector<6x52xf32> to vector<1x52xf32>
    %16 = vector.extract_strided_slice %2 {offsets = [5, 0], sizes = [1, 52], strides = [1, 1]} : vector<6x52xf32> to vector<1x52xf32>
    %17 = vector.extract_strided_slice %3 {offsets = [0, 0], sizes = [52, 1], strides = [1, 1]} : vector<52x4xf32> to vector<52x1xf32>
    %18 = vector.extract_strided_slice %3 {offsets = [0, 1], sizes = [52, 1], strides = [1, 1]} : vector<52x4xf32> to vector<52x1xf32>
    %19 = vector.extract_strided_slice %3 {offsets = [0, 2], sizes = [52, 1], strides = [1, 1]} : vector<52x4xf32> to vector<52x1xf32>
    %20 = vector.extract_strided_slice %3 {offsets = [0, 3], sizes = [52, 1], strides = [1, 1]} : vector<52x4xf32> to vector<52x1xf32>
    %21 = vector.broadcast %5 : vector<128x1xf32> to vector<128x52xf32>
    %22 = vector.broadcast %11 : vector<1x52xf32> to vector<128x52xf32>
    %23 = arith.subf %21, %22 : vector<128x52xf32>
    %24 = arith.mulf %23, %23 : vector<128x52xf32>
    %25 = vector.broadcast %6 : vector<128x1xf32> to vector<128x52xf32>
    %26 = vector.broadcast %12 : vector<1x52xf32> to vector<128x52xf32>
    %27 = arith.subf %25, %26 : vector<128x52xf32>
    %28 = arith.mulf %27, %27 : vector<128x52xf32>
    %29 = arith.addf %24, %28 : vector<128x52xf32>
    %cst = arith.constant 0.000000e+00 : f32
    %30 = vector.broadcast %cst : f32 to vector<128x52xf32>
    %31 = arith.subf %30, %29 : vector<128x52xf32>
    %32 = vector.broadcast %14 : vector<1x52xf32> to vector<128x52xf32>
    %33 = arith.mulf %31, %32 : vector<128x52xf32>
    %34 = math.exp %33 : vector<128x52xf32>
    %35 = vector.broadcast %13 : vector<1x52xf32> to vector<128x52xf32>
    %36 = arith.mulf %35, %34 : vector<128x52xf32>
    %37 = vector.broadcast %17 : vector<52x1xf32> to vector<52x128xf32>
    %38 = vector.broadcast %8 : vector<1x128xf32> to vector<52x128xf32>
    %39 = arith.subf %37, %38 : vector<52x128xf32>
    %40 = arith.mulf %39, %39 : vector<52x128xf32>
    %41 = vector.broadcast %18 : vector<52x1xf32> to vector<52x128xf32>
    %42 = vector.broadcast %9 : vector<1x128xf32> to vector<52x128xf32>
    %43 = arith.subf %41, %42 : vector<52x128xf32>
    %44 = arith.mulf %43, %43 : vector<52x128xf32>
    %45 = arith.addf %40, %44 : vector<52x128xf32>
    %cst_9 = arith.constant 0.000000e+00 : f32
    %46 = vector.broadcast %cst_9 : f32 to vector<52x128xf32>
    %47 = arith.subf %46, %45 : vector<52x128xf32>
    %48 = vector.broadcast %20 : vector<52x1xf32> to vector<52x128xf32>
    %49 = arith.mulf %47, %48 : vector<52x128xf32>
    %50 = math.exp %49 : vector<52x128xf32>
    %51 = vector.broadcast %19 : vector<52x1xf32> to vector<52x128xf32>
    %52 = arith.mulf %51, %50 : vector<52x128xf32>
    %cst_10 = arith.constant dense<0.000000e+00> : vector<128x52xf32>
    %53 = tpu.matmul %36, %4, %cst_10 {dimension_numbers = #tpu.dot_dimension_numbers<[1], [0], [0], [1], [0, 0, 1, 1], [], []>} : vector<128x52xf32>, vector<52x52xf32>, vector<128x52xf32> -> vector<128x52xf32>
    %54 = vector.extract_strided_slice %53 {offsets = [0, 50], sizes = [128, 1], strides = [1, 1]} : vector<128x52xf32> to vector<128x1xf32>
    %55 = vector.extract_strided_slice %53 {offsets = [0, 51], sizes = [128, 1], strides = [1, 1]} : vector<128x52xf32> to vector<128x1xf32>
    %cst_11 = arith.constant dense<0.000000e+00> : vector<1x128xf32>
    %56 = tpu.matmul %16, %52, %cst_11 {dimension_numbers = #tpu.dot_dimension_numbers<[1], [0], [0], [1], [0, 0, 1, 1], [], []>} : vector<1x52xf32>, vector<52x128xf32>, vector<1x128xf32> -> vector<1x128xf32>
    %57 = vector.broadcast %15 : vector<1x52xf32> to vector<128x52xf32>
    %58 = arith.mulf %57, %53 : vector<128x52xf32>
    %59 = arith.subf %53, %58 : vector<128x52xf32>
    %cst_12 = arith.constant dense<0.000000e+00> : vector<128x128xf32>
    %60 = tpu.matmul %58, %52, %cst_12 {dimension_numbers = #tpu.dot_dimension_numbers<[1], [0], [0], [1], [0, 0, 1, 1], [], []>} : vector<128x52xf32>, vector<52x128xf32>, vector<128x128xf32> -> vector<128x128xf32>
    %cst_13 = arith.constant dense<0.000000e+00> : vector<128x128xf32>
    %61 = tpu.matmul %59, %52, %cst_13 {dimension_numbers = #tpu.dot_dimension_numbers<[1], [0], [0], [1], [0, 0, 1, 1], [], []>} : vector<128x52xf32>, vector<52x128xf32>, vector<128x128xf32> -> vector<128x128xf32>
    %62 = vector.broadcast %5 : vector<128x1xf32> to vector<128x128xf32>
    %63 = vector.broadcast %8 : vector<1x128xf32> to vector<128x128xf32>
    %64 = arith.subf %62, %63 : vector<128x128xf32>
    %65 = arith.mulf %64, %64 : vector<128x128xf32>
    %66 = vector.broadcast %6 : vector<128x1xf32> to vector<128x128xf32>
    %67 = vector.broadcast %9 : vector<1x128xf32> to vector<128x128xf32>
    %68 = arith.subf %66, %67 : vector<128x128xf32>
    %69 = arith.mulf %68, %68 : vector<128x128xf32>
    %70 = arith.addf %65, %69 : vector<128x128xf32>
    %c128_i32 = arith.constant 128 : i32
    %71 = arith.muli %arg0, %c128_i32 : i32
    %72 = tpu.iota {dimensions = array<i32: 0>} : vector<128x1xi32>
    %73 = vector.broadcast %71 : i32 to vector<128x1xi32>
    %74 = arith.addi %73, %72 : vector<128x1xi32>
    %75 = tpu.iota {dimensions = array<i32: 1>} : vector<1x128xi32>
    %76 = vector.broadcast %74 : vector<128x1xi32> to vector<128x128xi32>
    %77 = vector.broadcast %75 : vector<1x128xi32> to vector<128x128xi32>
    %78 = arith.cmpi eq, %76, %77 : vector<128x128xi32>
    %cst_14 = arith.constant 9.99999997E-7 : f32
    %cst_15 = arith.constant 0.000000e+00 : f32
    %79 = vector.broadcast %cst_14 : f32 to vector<128x128xf32>
    %80 = vector.broadcast %cst_15 : f32 to vector<128x128xf32>
    %81 = arith.select %78, %79, %80 : vector<128x128xi1>, vector<128x128xf32>
    %cst_16 = arith.constant 0.000000e+00 : f32
    %82 = vector.broadcast %cst_16 : f32 to vector<128x128xf32>
    %83 = arith.subf %82, %70 : vector<128x128xf32>
    %cst_17 = arith.constant 1.04068446 : f32
    %84 = vector.broadcast %cst_17 : f32 to vector<128x128xf32>
    %85 = arith.mulf %83, %84 : vector<128x128xf32>
    %86 = math.exp %85 : vector<128x128xf32>
    %cst_18 = arith.constant 0.693147182 : f32
    %87 = vector.broadcast %cst_18 : f32 to vector<128x128xf32>
    %88 = arith.mulf %87, %86 : vector<128x128xf32>
    %89 = arith.addf %88, %81 : vector<128x128xf32>
    %cst_19 = arith.constant 0.693147182 : f32
    %90 = vector.broadcast %cst_19 : f32 to vector<128x128xf32>
    %91 = arith.mulf %90, %86 : vector<128x128xf32>
    %92 = arith.addf %91, %81 : vector<128x128xf32>
    %93 = arith.addf %89, %60 : vector<128x128xf32>
    %94 = arith.addf %92, %61 : vector<128x128xf32>
    %cst_20 = arith.constant 5.000000e-01 : f32
    %95 = vector.broadcast %cst_20 : f32 to vector<128x1xf32>
    %96 = arith.mulf %95, %55 : vector<128x1xf32>
    %97 = arith.mulf %96, %55 : vector<128x1xf32>
    %cst_21 = arith.constant 1.000000e+00 : f32
    %98 = vector.broadcast %cst_21 : f32 to vector<128x1xf32>
    %99 = arith.addf %98, %97 : vector<128x1xf32>
    %100 = vector.broadcast %55 : vector<128x1xf32> to vector<128x128xf32>
    %101 = vector.broadcast %56 : vector<1x128xf32> to vector<128x128xf32>
    %102 = arith.mulf %100, %101 : vector<128x128xf32>
    %103 = arith.mulf %102, %94 : vector<128x128xf32>
    %104 = arith.mulf %99, %7 : vector<128x1xf32>
    %105 = arith.addf %54, %104 : vector<128x1xf32>
    %106 = vector.broadcast %7 : vector<128x1xf32> to vector<128x128xf32>
    %107 = vector.broadcast %10 : vector<1x128xf32> to vector<128x128xf32>
    %108 = arith.mulf %106, %107 : vector<128x128xf32>
    %109 = arith.mulf %108, %103 : vector<128x128xf32>
    %110 = arith.addf %93, %109 : vector<128x128xf32>
    %c0_22 = arith.constant 0 : index
    %c0_23 = arith.constant 0 : index
    %111 = vector.load %arg7[%c0_22, %c0_23] : memref<128x128xf32, #tpu.memory_space<vmem>>, vector<128x128xf32>
    tpu.vector_store %arg7[%c0_22, %c0_23], %110 {strides = array<i32>} : memref<128x128xf32, #tpu.memory_space<vmem>>, vector<128x128xf32>,
    %c0_24 = arith.constant 0 : index
    %c0_25 = arith.constant 0 : index
    %112 = vector.load %arg8[%c0_24, %c0_25] : memref<128x128xf32, #tpu.memory_space<vmem>>, vector<128x128xf32>
    tpu.vector_store %arg8[%c0_24, %c0_25], %93 {strides = array<i32>} : memref<128x128xf32, #tpu.memory_space<vmem>>, vector<128x128xf32>,
    %c0_26 = arith.constant 0 : index
    %c0_27 = arith.constant 0 : index
    %113 = vector.load %arg9[%c0_26, %c0_27] : memref<128x128xf32, #tpu.memory_space<vmem>>, vector<128x128xf32>
    tpu.vector_store %arg9[%c0_26, %c0_27], %103 {strides = array<i32>} : memref<128x128xf32, #tpu.memory_space<vmem>>, vector<128x128xf32>,
    %cst_28 = arith.constant 0.000000e+00 : f32
    %114 = vector.broadcast %cst_28 : f32 to vector<128x5xf32>
    %115 = tpu.concatenate %105, %54, %99, %114 in 1 : vector<128x1xf32>, vector<128x1xf32>, vector<128x1xf32>, vector<128x5xf32> -> vector<128x8xf32>
    %c0_29 = arith.constant 0 : index
    %c0_30 = arith.constant 0 : index
    %116 = vector.load %arg6[%c0_29, %c0_30] : memref<128x8xf32, #tpu.memory_space<vmem>>, vector<128x8xf32>
    tpu.vector_store %arg6[%c0_29, %c0_30], %115 {strides = array<i32>} : memref<128x8xf32, #tpu.memory_space<vmem>>, vector<128x8xf32>,
    return
  }
  func.func @transform_0(%arg0: i32) -> (i32, i32) {
    %c0_i32 = arith.constant 0 : i32
    %c0_i32_0 = arith.constant 0 : i32
    return %arg0, %c0_i32 : i32, i32
  }
  func.func @transform_1(%arg0: i32) -> (i32, i32) {
    %c0_i32 = arith.constant 0 : i32
    %c0_i32_0 = arith.constant 0 : i32
    %c0_i32_1 = arith.constant 0 : i32
    return %c0_i32, %c0_i32_0 : i32, i32
  }
  func.func @transform_2(%arg0: i32) -> (i32, i32) {
    %c0_i32 = arith.constant 0 : i32
    %c0_i32_0 = arith.constant 0 : i32
    %c0_i32_1 = arith.constant 0 : i32
    return %c0_i32, %c0_i32_0 : i32, i32
  }
  func.func @transform_3(%arg0: i32) -> (i32, i32) {
    %c0_i32 = arith.constant 0 : i32
    %c0_i32_0 = arith.constant 0 : i32
    %c0_i32_1 = arith.constant 0 : i32
    return %c0_i32, %c0_i32_0 : i32, i32
  }
  func.func @transform_4(%arg0: i32) -> (i32, i32) {
    %c0_i32 = arith.constant 0 : i32
    %c0_i32_0 = arith.constant 0 : i32
    %c0_i32_1 = arith.constant 0 : i32
    return %c0_i32, %c0_i32_0 : i32, i32
  }
  func.func @transform_5(%arg0: i32) -> (i32, i32) {
    %c0_i32 = arith.constant 0 : i32
    %c0_i32_0 = arith.constant 0 : i32
    return %arg0, %c0_i32 : i32, i32
  }
  func.func @transform_6(%arg0: i32) -> (i32, i32) {
    %c0_i32 = arith.constant 0 : i32
    %c0_i32_0 = arith.constant 0 : i32
    return %arg0, %c0_i32 : i32, i32
  }
  func.func @transform_7(%arg0: i32) -> (i32, i32) {
    %c0_i32 = arith.constant 0 : i32
    %c0_i32_0 = arith.constant 0 : i32
    return %arg0, %c0_i32 : i32, i32
  }
  func.func @transform_8(%arg0: i32) -> (i32, i32) {
    %c0_i32 = arith.constant 0 : i32
    %c0_i32_0 = arith.constant 0 : i32
    return %arg0, %c0_i32 : i32, i32
  }
}

</mosaic_0001>

<llo_original>
// kernel: tpu_custom_call.1
$region0: #{tpu_custom_call.1}
  #allocation0 [shape = 'u32[]', space=smem, size = 0x4, offset = 0x4, fixed_abs, tag = 'smem constant byte address 0x4 - core index']
  #allocation1 [shape = 'u32[144,128]{1,0:T(1,128)}', space=vmem, size = 0x12000, scoped, tag = 'internal scratch']
  %s0 = inlined_call_operand.vmem [shape: f32[128,3], index: 0, kind: input, shape index: {}]
  %s1 = inlined_call_operand.vmem [shape: f32[3,128], index: 1, kind: input, shape index: {}]
  %s2 = inlined_call_operand.vmem [shape: f32[6,52], index: 2, kind: input, shape index: {}]
  %s3 = inlined_call_operand.vmem [shape: f32[52,4], index: 3, kind: input, shape index: {}]
  %s4 = inlined_call_operand.vmem [shape: f32[52,52], index: 4, kind: input, shape index: {}]
  %s5 = inlined_call_operand.vmem [shape: f32[128,8], index: 5, kind: output, shape index: {0}]
  %s6 = inlined_call_operand.hbm [shape: f32[128,128], index: 6, kind: output, shape index: {1}]
  %s7 = inlined_call_operand.hbm [shape: f32[128,128], index: 7, kind: output, shape index: {2}]
  %s8 = inlined_call_operand.hbm [shape: f32[128,128], index: 8, kind: output, shape index: {3}]
  %9 = xla_tuple %s5, %s6, %s7, %s8
  %s10 = sld [smem:[#allocation0]]
  $region54: #{tpu_custom_call.1} parent=0
    _
  %s12 = ssub.s32 1, %s10
  %s13 = scalar_select 0, %s12, %s10
  $region1: #{tpu_custom_call.1} parent=0
    #allocation2 [shape = 'u8[65536]{0}', space=vmem, size = 0x10000, scoped, tag = 'output window, operand 1, single buffered']
    #allocation3 [shape = 's32[1]{0}', space=sflag, size = 0x4, scoped, tag = 'scoped memory for tpu_custom_call.1']
    #allocation4 [shape = 'u8[65536]{0}', space=vmem, size = 0x10000, scoped, tag = 'output window, operand 2, single buffered']
    #allocation5 [shape = 's32[1]{0}', space=sflag, size = 0x4, scoped, tag = 'scoped memory for tpu_custom_call.1']
    #allocation6 [shape = 'u8[65536]{0}', space=vmem, size = 0x10000, scoped, tag = 'output window, operand 3, single buffered']
    %14 = vsyncpa [#allocation3], 0
    %15 = vsyncpa [#allocation5], 0
    // Predicated region
    $region2: #{tpu_custom_call.1} parent=1 // pred_check
      _
    $region3: #{tpu_custom_call.1} parent=1 // pred_check_branch
      %17 = sbr.rel (0) target = $region5
    $region4: #{tpu_custom_call.1} parent=1 // pred_region
      _
    $region5: #{tpu_custom_call.1} parent=1 // pred_fallthru
      _
    // Predicated region
    $region6: #{tpu_custom_call.1} parent=1 // pred_check
      _
    $region7: #{tpu_custom_call.1} parent=1 // pred_check_branch
      %19 = sbr.rel (0) target = $region9
    $region8: #{tpu_custom_call.1} parent=1 // pred_region
      _
    $region9: #{tpu_custom_call.1} parent=1 // pred_fallthru
      _
    // Predicated region
    $region10: #{tpu_custom_call.1} parent=1 // pred_check
      _
    $region11: #{tpu_custom_call.1} parent=1 // pred_check_branch
      %21 = sbr.rel (0) target = $region13
    $region12: #{tpu_custom_call.1} parent=1 // pred_region
      _
    $region13: #{tpu_custom_call.1} parent=1 // pred_fallthru
      _
    // Predicated region
    $region14: #{tpu_custom_call.1} parent=1 // pred_check
      _
    $region15: #{tpu_custom_call.1} parent=1 // pred_check_branch
      %23 = sbr.rel (0) target = $region17
    $region16: #{tpu_custom_call.1} parent=1 // pred_region
      _
    $region17: #{tpu_custom_call.1} parent=1 // pred_fallthru
      _
    // Predicated region
    $region18: #{tpu_custom_call.1} parent=1 // pred_check
      _
    $region19: #{tpu_custom_call.1} parent=1 // pred_check_branch
      %25 = sbr.rel (0) target = $region21
    $region20: #{tpu_custom_call.1} parent=1 // pred_region
      _
    $region21: #{tpu_custom_call.1} parent=1 // pred_fallthru
      _
    %v26 = vld [vmem:[%s0] sm:$0xff]
    %v27 = vld [vmem:[%s0 + $0x8] sm:$0xff]
    %v28 = vld [vmem:[%s0 + $0x10] sm:$0xff]
    %v29 = vld [vmem:[%s0 + $0x18] sm:$0xff]
    %v30 = vld [vmem:[%s0 + $0x20] sm:$0xff]
    %v31 = vld [vmem:[%s0 + $0x28] sm:$0xff]
    %v32 = vld [vmem:[%s0 + $0x30] sm:$0xff]
    %v33 = vld [vmem:[%s0 + $0x38] sm:$0xff]
    %v34 = vld [vmem:[%s0 + $0x40] sm:$0xff]
    %v35 = vld [vmem:[%s0 + $0x48] sm:$0xff]
    %v36 = vld [vmem:[%s0 + $0x50] sm:$0xff]
    %v37 = vld [vmem:[%s0 + $0x58] sm:$0xff]
    %v38 = vld [vmem:[%s0 + $0x60] sm:$0xff]
    %v39 = vld [vmem:[%s0 + $0x68] sm:$0xff]
    %v40 = vld [vmem:[%s0 + $0x70] sm:$0xff]
    %v41 = vld [vmem:[%s0 + $0x78] sm:$0xff]
    %v42 = vld [vmem:[%s1] sm:$0x7]
    %v43 = vld [vmem:[%s2] sm:$0x3f]
    %v44 = vld [vmem:[%s3] sm:$0xff]
    %v45 = vld [vmem:[%s3 + $0x8] sm:$0xff]
    %v46 = vld [vmem:[%s3 + $0x10] sm:$0xff]
    %v47 = vld [vmem:[%s3 + $0x18] sm:$0xff]
    %v48 = vld [vmem:[%s3 + $0x20] sm:$0xff]
    %v49 = vld [vmem:[%s3 + $0x28] sm:$0xff]
    %v50 = vld [vmem:[%s3 + $0x30] sm:$0xf]
    %v51 = vld [vmem:[%s4] sm:$0xff]
    %v52 = vld [vmem:[%s4 + $0x8] sm:$0xff]
    %v53 = vld [vmem:[%s4 + $0x10] sm:$0xff]
    %v54 = vld [vmem:[%s4 + $0x18] sm:$0xff]
    %v55 = vld [vmem:[%s4 + $0x20] sm:$0xff]
    %v56 = vld [vmem:[%s4 + $0x28] sm:$0xff]
    %v57 = vld [vmem:[%s4 + $0x30] sm:$0xf]
    %59 = vset.pattern.permute.xlu0 0
    %60 = vperm.xlu0 %59, %v26
    %v61 = vpop.permute.xlu0 %60
    %64 = vset.pattern.permute.xlu0 0
    %65 = vperm.xlu0 %64, %v27
    %v66 = vpop.permute.xlu0 %65
    %69 = vset.pattern.permute.xlu0 0
    %70 = vperm.xlu0 %69, %v28
    %v71 = vpop.permute.xlu0 %70
    %74 = vset.pattern.permute.xlu0 0
    %75 = vperm.xlu0 %74, %v29
    %v76 = vpop.permute.xlu0 %75
    %79 = vset.pattern.permute.xlu0 0
    %80 = vperm.xlu0 %79, %v30
    %v81 = vpop.permute.xlu0 %80
    %84 = vset.pattern.permute.xlu0 0
    %85 = vperm.xlu0 %84, %v31
    %v86 = vpop.permute.xlu0 %85
    %89 = vset.pattern.permute.xlu0 0
    %90 = vperm.xlu0 %89, %v32
    %v91 = vpop.permute.xlu0 %90
    %94 = vset.pattern.permute.xlu0 0
    %95 = vperm.xlu0 %94, %v33
    %v96 = vpop.permute.xlu0 %95
    %99 = vset.pattern.permute.xlu0 0
    %100 = vperm.xlu0 %99, %v34
    %v101 = vpop.permute.xlu0 %100
    %104 = vset.pattern.permute.xlu0 0
    %105 = vperm.xlu0 %104, %v35
    %v106 = vpop.permute.xlu0 %105
    %109 = vset.pattern.permute.xlu0 0
    %110 = vperm.xlu0 %109, %v36
    %v111 = vpop.permute.xlu0 %110
    %114 = vset.pattern.permute.xlu0 0
    %115 = vperm.xlu0 %114, %v37
    %v116 = vpop.permute.xlu0 %115
    %119 = vset.pattern.permute.xlu0 0
    %120 = vperm.xlu0 %119, %v38
    %v121 = vpop.permute.xlu0 %120
    %124 = vset.pattern.permute.xlu0 0
    %125 = vperm.xlu0 %124, %v39
    %v126 = vpop.permute.xlu0 %125
    %129 = vset.pattern.permute.xlu0 0
    %130 = vperm.xlu0 %129, %v40
    %v131 = vpop.permute.xlu0 %130
    %134 = vset.pattern.permute.xlu0 0
    %135 = vperm.xlu0 %134, %v41
    %v136 = vpop.permute.xlu0 %135
    %v138 = vlaneseq
    %v139 = vshrl.u32 %v138, 7
    %v140 = vsub.s32 0, %v139
    %v141 = vrot.slane %v43, %v140
    %v142 = vsub.f32 %v61, %v141
    %v143 = vsub.f32 %v66, %v141
    %v144 = vsub.f32 %v71, %v141
    %v145 = vsub.f32 %v76, %v141
    %v146 = vsub.f32 %v81, %v141
    %v147 = vsub.f32 %v86, %v141
    %v148 = vsub.f32 %v91, %v141
    %v149 = vsub.f32 %v96, %v141
    %v150 = vsub.f32 %v101, %v141
    %v151 = vsub.f32 %v106, %v141
    %v152 = vsub.f32 %v111, %v141
    %v153 = vsub.f32 %v116, %v141
    %v154 = vsub.f32 %v121, %v141
    %v155 = vsub.f32 %v126, %v141
    %v156 = vsub.f32 %v131, %v141
    %v157 = vsub.f32 %v136, %v141
    %v158 = vmul.f32 %v142, %v142
    %v159 = vmul.f32 %v143, %v143
    %v160 = vmul.f32 %v144, %v144
    %v161 = vmul.f32 %v145, %v145
    %v162 = vmul.f32 %v146, %v146
    %v163 = vmul.f32 %v147, %v147
    %v164 = vmul.f32 %v148, %v148
    %v165 = vmul.f32 %v149, %v149
    %v166 = vmul.f32 %v150, %v150
    %v167 = vmul.f32 %v151, %v151
    %v168 = vmul.f32 %v152, %v152
    %v169 = vmul.f32 %v153, %v153
    %v170 = vmul.f32 %v154, %v154
    %v171 = vmul.f32 %v155, %v155
    %v172 = vmul.f32 %v156, %v156
    %v173 = vmul.f32 %v157, %v157
    %174 = vset.pattern.permute.xlu0 1
    %175 = vperm.xlu0 %174, %v26
    %v176 = vpop.permute.xlu0 %175
    %178 = vset.pattern.permute.xlu0 1
    %179 = vperm.xlu0 %178, %v27
    %v180 = vpop.permute.xlu0 %179
    %182 = vset.pattern.permute.xlu0 1
    %183 = vperm.xlu0 %182, %v28
    %v184 = vpop.permute.xlu0 %183
    %186 = vset.pattern.permute.xlu0 1
    %187 = vperm.xlu0 %186, %v29
    %v188 = vpop.permute.xlu0 %187
    %190 = vset.pattern.permute.xlu0 1
    %191 = vperm.xlu0 %190, %v30
    %v192 = vpop.permute.xlu0 %191
    %194 = vset.pattern.permute.xlu0 1
    %195 = vperm.xlu0 %194, %v31
    %v196 = vpop.permute.xlu0 %195
    %198 = vset.pattern.permute.xlu0 1
    %199 = vperm.xlu0 %198, %v32
    %v200 = vpop.permute.xlu0 %199
    %202 = vset.pattern.permute.xlu0 1
    %203 = vperm.xlu0 %202, %v33
    %v204 = vpop.permute.xlu0 %203
    %206 = vset.pattern.permute.xlu0 1
    %207 = vperm.xlu0 %206, %v34
    %v208 = vpop.permute.xlu0 %207
    %210 = vset.pattern.permute.xlu0 1
    %211 = vperm.xlu0 %210, %v35
    %v212 = vpop.permute.xlu0 %211
    %214 = vset.pattern.permute.xlu0 1
    %215 = vperm.xlu0 %214, %v36
    %v216 = vpop.permute.xlu0 %215
    %218 = vset.pattern.permute.xlu0 1
    %219 = vperm.xlu0 %218, %v37
    %v220 = vpop.permute.xlu0 %219
    %222 = vset.pattern.permute.xlu0 1
    %223 = vperm.xlu0 %222, %v38
    %v224 = vpop.permute.xlu0 %223
    %226 = vset.pattern.permute.xlu0 1
    %227 = vperm.xlu0 %226, %v39
    %v228 = vpop.permute.xlu0 %227
    %230 = vset.pattern.permute.xlu0 1
    %231 = vperm.xlu0 %230, %v40
    %v232 = vpop.permute.xlu0 %231
    %234 = vset.pattern.permute.xlu0 1
    %235 = vperm.xlu0 %234, %v41
    %v236 = vpop.permute.xlu0 %235
    %v238 = vlaneseq
    %v239 = vshrl.u32 %v238, 7
    %v240 = vsub.s32 1, %v239
    %v241 = vrot.slane %v43, %v240
    %v242 = vsub.f32 %v176, %v241
    %v243 = vsub.f32 %v180, %v241
    %v244 = vsub.f32 %v184, %v241
    %v245 = vsub.f32 %v188, %v241
    %v246 = vsub.f32 %v192, %v241
    %v247 = vsub.f32 %v196, %v241
    %v248 = vsub.f32 %v200, %v241
    %v249 = vsub.f32 %v204, %v241
    %v250 = vsub.f32 %v208, %v241
    %v251 = vsub.f32 %v212, %v241
    %v252 = vsub.f32 %v216, %v241
    %v253 = vsub.f32 %v220, %v241
    %v254 = vsub.f32 %v224, %v241
    %v255 = vsub.f32 %v228, %v241
    %v256 = vsub.f32 %v232, %v241
    %v257 = vsub.f32 %v236, %v241
    %v258 = vmul.f32 %v242, %v242
    %v259 = vmul.f32 %v243, %v243
    %v260 = vmul.f32 %v244, %v244
    %v261 = vmul.f32 %v245, %v245
    %v262 = vmul.f32 %v246, %v246
    %v263 = vmul.f32 %v247, %v247
    %v264 = vmul.f32 %v248, %v248
    %v265 = vmul.f32 %v249, %v249
    %v266 = vmul.f32 %v250, %v250
    %v267 = vmul.f32 %v251, %v251
    %v268 = vmul.f32 %v252, %v252
    %v269 = vmul.f32 %v253, %v253
    %v270 = vmul.f32 %v254, %v254
    %v271 = vmul.f32 %v255, %v255
    %v272 = vmul.f32 %v256, %v256
    %v273 = vmul.f32 %v257, %v257
    %v274 = vadd.f32 %v158, %v258
    %v275 = vadd.f32 %v159, %v259
    %v276 = vadd.f32 %v160, %v260
    %v277 = vadd.f32 %v161, %v261
    %v278 = vadd.f32 %v162, %v262
    %v279 = vadd.f32 %v163, %v263
    %v280 = vadd.f32 %v164, %v264
    %v281 = vadd.f32 %v165, %v265
    %v282 = vadd.f32 %v166, %v266
    %v283 = vadd.f32 %v167, %v267
    %v284 = vadd.f32 %v168, %v268
    %v285 = vadd.f32 %v169, %v269
    %v286 = vadd.f32 %v170, %v270
    %v287 = vadd.f32 %v171, %v271
    %v288 = vadd.f32 %v172, %v272
    %v289 = vadd.f32 %v173, %v273
    %v290 = vsub.f32 0.0, %v274
    %v291 = vsub.f32 0.0, %v275
    %v292 = vsub.f32 0.0, %v276
    %v293 = vsub.f32 0.0, %v277
    %v294 = vsub.f32 0.0, %v278
    %v295 = vsub.f32 0.0, %v279
    %v296 = vsub.f32 0.0, %v280
    %v297 = vsub.f32 0.0, %v281
    %v298 = vsub.f32 0.0, %v282
    %v299 = vsub.f32 0.0, %v283
    %v300 = vsub.f32 0.0, %v284
    %v301 = vsub.f32 0.0, %v285
    %v302 = vsub.f32 0.0, %v286
    %v303 = vsub.f32 0.0, %v287
    %v304 = vsub.f32 0.0, %v288
    %v305 = vsub.f32 0.0, %v289
    %v306 = vlaneseq
    %v307 = vshrl.u32 %v306, 7
    %v308 = vsub.s32 3, %v307
    %v309 = vrot.slane %v43, %v308
    %v310 = vmul.f32 %v290, %v309
    %v311 = vmul.f32 %v291, %v309
    %v312 = vmul.f32 %v292, %v309
    %v313 = vmul.f32 %v293, %v309
    %v314 = vmul.f32 %v294, %v309
    %v315 = vmul.f32 %v295, %v309
    %v316 = vmul.f32 %v296, %v309
    %v317 = vmul.f32 %v297, %v309
    %v318 = vmul.f32 %v298, %v309
    %v319 = vmul.f32 %v299, %v309
    %v320 = vmul.f32 %v300, %v309
    %v321 = vmul.f32 %v301, %v309
    %v322 = vmul.f32 %v302, %v309
    %v323 = vmul.f32 %v303, %v309
    %v324 = vmul.f32 %v304, %v309
    %v325 = vmul.f32 %v305, %v309
    %v326 = vmul.f32 %v310, 1.442695
    %v327 = vpow.pop %v326
    %v328 = vmul.f32 %v311, 1.442695
    %v329 = vpow.pop %v328
    %v330 = vmul.f32 %v312, 1.442695
    %v331 = vpow.pop %v330
    %v332 = vmul.f32 %v313, 1.442695
    %v333 = vpow.pop %v332
    %v334 = vmul.f32 %v314, 1.442695
    %v335 = vpow.pop %v334
    %v336 = vmul.f32 %v315, 1.442695
    %v337 = vpow.pop %v336
    %v338 = vmul.f32 %v316, 1.442695
    %v339 = vpow.pop %v338
    %v340 = vmul.f32 %v317, 1.442695
    %v341 = vpow.pop %v340
    %v342 = vmul.f32 %v318, 1.442695
    %v343 = vpow.pop %v342
    %v344 = vmul.f32 %v319, 1.442695
    %v345 = vpow.pop %v344
    %v346 = vmul.f32 %v320, 1.442695
    %v347 = vpow.pop %v346
    %v348 = vmul.f32 %v321, 1.442695
    %v349 = vpow.pop %v348
    %v350 = vmul.f32 %v322, 1.442695
    %v351 = vpow.pop %v350
    %v352 = vmul.f32 %v323, 1.442695
    %v353 = vpow.pop %v352
    %v354 = vmul.f32 %v324, 1.442695
    %v355 = vpow.pop %v354
    %v356 = vmul.f32 %v325, 1.442695
    %v357 = vpow.pop %v356
    %v358 = vlaneseq
    %v359 = vshrl.u32 %v358, 7
    %v360 = vsub.s32 2, %v359
    %v361 = vrot.slane %v43, %v360
    %v362 = vmul.f32 %v361, %v327
    %v363 = vmul.f32 %v361, %v329
    %v364 = vmul.f32 %v361, %v331
    %v365 = vmul.f32 %v361, %v333
    %v366 = vmul.f32 %v361, %v335
    %v367 = vmul.f32 %v361, %v337
    %v368 = vmul.f32 %v361, %v339
    %v369 = vmul.f32 %v361, %v341
    %v370 = vmul.f32 %v361, %v343
    %v371 = vmul.f32 %v361, %v345
    %v372 = vmul.f32 %v361, %v347
    %v373 = vmul.f32 %v361, %v349
    %v374 = vmul.f32 %v361, %v351
    %v375 = vmul.f32 %v361, %v353
    %v376 = vmul.f32 %v361, %v355
    %v377 = vmul.f32 %v361, %v357
    %379 = vset.pattern.permute.xlu0 0
    %380 = vperm.xlu0 %379, %v44
    %v381 = vpop.permute.xlu0 %380
    %384 = vset.pattern.permute.xlu0 0
    %385 = vperm.xlu0 %384, %v45
    %v386 = vpop.permute.xlu0 %385
    %389 = vset.pattern.permute.xlu0 0
    %390 = vperm.xlu0 %389, %v46
    %v391 = vpop.permute.xlu0 %390
    %394 = vset.pattern.permute.xlu0 0
    %395 = vperm.xlu0 %394, %v47
    %v396 = vpop.permute.xlu0 %395
    %399 = vset.pattern.permute.xlu0 0
    %400 = vperm.xlu0 %399, %v48
    %v401 = vpop.permute.xlu0 %400
    %404 = vset.pattern.permute.xlu0 0
    %405 = vperm.xlu0 %404, %v49
    %v406 = vpop.permute.xlu0 %405
    %409 = vset.pattern.permute.xlu0 0
    %410 = vperm.xlu0 %409, %v50
    %v411 = vpop.permute.xlu0 %410
    %v413 = vlaneseq
    %v414 = vshrl.u32 %v413, 7
    %v415 = vsub.s32 0, %v414
    %v416 = vrot.slane %v42, %v415
    %v417 = vsub.f32 %v381, %v416
    %v418 = vsub.f32 %v386, %v416
    %v419 = vsub.f32 %v391, %v416
    %v420 = vsub.f32 %v396, %v416
    %v421 = vsub.f32 %v401, %v416
    %v422 = vsub.f32 %v406, %v416
    %v423 = vsub.f32 %v411, %v416
    %v424 = vmul.f32 %v417, %v417
    %v425 = vmul.f32 %v418, %v418
    %v426 = vmul.f32 %v419, %v419
    %v427 = vmul.f32 %v420, %v420
    %v428 = vmul.f32 %v421, %v421
    %v429 = vmul.f32 %v422, %v422
    %v430 = vmul.f32 %v423, %v423
    %431 = vset.pattern.permute.xlu0 1
    %432 = vperm.xlu0 %431, %v44
    %v433 = vpop.permute.xlu0 %432
    %435 = vset.pattern.permute.xlu0 1
    %436 = vperm.xlu0 %435, %v45
    %v437 = vpop.permute.xlu0 %436
    %439 = vset.pattern.permute.xlu0 1
    %440 = vperm.xlu0 %439, %v46
    %v441 = vpop.permute.xlu0 %440
    %443 = vset.pattern.permute.xlu0 1
    %444 = vperm.xlu0 %443, %v47
    %v445 = vpop.permute.xlu0 %444
    %447 = vset.pattern.permute.xlu0 1
    %448 = vperm.xlu0 %447, %v48
    %v449 = vpop.permute.xlu0 %448
    %451 = vset.pattern.permute.xlu0 1
    %452 = vperm.xlu0 %451, %v49
    %v453 = vpop.permute.xlu0 %452
    %455 = vset.pattern.permute.xlu0 1
    %456 = vperm.xlu0 %455, %v50
    %v457 = vpop.permute.xlu0 %456
    %v459 = vlaneseq
    %v460 = vshrl.u32 %v459, 7
    %v461 = vsub.s32 1, %v460
    %v462 = vrot.slane %v42, %v461
    %v463 = vsub.f32 %v433, %v462
    %v464 = vsub.f32 %v437, %v462
    %v465 = vsub.f32 %v441, %v462
    %v466 = vsub.f32 %v445, %v462
    %v467 = vsub.f32 %v449, %v462
    %v468 = vsub.f32 %v453, %v462
    %v469 = vsub.f32 %v457, %v462
    %v470 = vmul.f32 %v463, %v463
    %v471 = vmul.f32 %v464, %v464
    %v472 = vmul.f32 %v465, %v465
    %v473 = vmul.f32 %v466, %v466
    %v474 = vmul.f32 %v467, %v467
    %v475 = vmul.f32 %v468, %v468
    %v476 = vmul.f32 %v469, %v469
    %v477 = vadd.f32 %v424, %v470
    %v478 = vadd.f32 %v425, %v471
    %v479 = vadd.f32 %v426, %v472
    %v480 = vadd.f32 %v427, %v473
    %v481 = vadd.f32 %v428, %v474
    %v482 = vadd.f32 %v429, %v475
    %v483 = vadd.f32 %v430, %v476
    %v484 = vsub.f32 0.0, %v477
    %v485 = vsub.f32 0.0, %v478
    %v486 = vsub.f32 0.0, %v479
    %v487 = vsub.f32 0.0, %v480
    %v488 = vsub.f32 0.0, %v481
    %v489 = vsub.f32 0.0, %v482
    %v490 = vsub.f32 0.0, %v483
    %491 = vset.pattern.permute.xlu0 3
    %492 = vperm.xlu0 %491, %v44
    %v493 = vpop.permute.xlu0 %492
    %495 = vset.pattern.permute.xlu0 3
    %496 = vperm.xlu0 %495, %v45
    %v497 = vpop.permute.xlu0 %496
    %499 = vset.pattern.permute.xlu0 3
    %500 = vperm.xlu0 %499, %v46
    %v501 = vpop.permute.xlu0 %500
    %503 = vset.pattern.permute.xlu0 3
    %504 = vperm.xlu0 %503, %v47
    %v505 = vpop.permute.xlu0 %504
    %507 = vset.pattern.permute.xlu0 3
    %508 = vperm.xlu0 %507, %v48
    %v509 = vpop.permute.xlu0 %508
    %511 = vset.pattern.permute.xlu0 3
    %512 = vperm.xlu0 %511, %v49
    %v513 = vpop.permute.xlu0 %512
    %515 = vset.pattern.permute.xlu0 3
    %516 = vperm.xlu0 %515, %v50
    %v517 = vpop.permute.xlu0 %516
    %v519 = vmul.f32 %v484, %v493
    %v520 = vmul.f32 %v485, %v497
    %v521 = vmul.f32 %v486, %v501
    %v522 = vmul.f32 %v487, %v505
    %v523 = vmul.f32 %v488, %v509
    %v524 = vmul.f32 %v489, %v513
    %v525 = vmul.f32 %v490, %v517
    %v526 = vmul.f32 %v519, 1.442695
    %v527 = vpow.pop %v526
    %v528 = vmul.f32 %v520, 1.442695
    %v529 = vpow.pop %v528
    %v530 = vmul.f32 %v521, 1.442695
    %v531 = vpow.pop %v530
    %v532 = vmul.f32 %v522, 1.442695
    %v533 = vpow.pop %v532
    %v534 = vmul.f32 %v523, 1.442695
    %v535 = vpow.pop %v534
    %v536 = vmul.f32 %v524, 1.442695
    %v537 = vpow.pop %v536
    %v538 = vmul.f32 %v525, 1.442695
    %v539 = vpow.pop %v538
    %540 = vset.pattern.permute.xlu0 2
    %541 = vperm.xlu0 %540, %v44
    %v542 = vpop.permute.xlu0 %541
    %544 = vset.pattern.permute.xlu0 2
    %545 = vperm.xlu0 %544, %v45
    %v546 = vpop.permute.xlu0 %545
    %548 = vset.pattern.permute.xlu0 2
    %549 = vperm.xlu0 %548, %v46
    %v550 = vpop.permute.xlu0 %549
    %552 = vset.pattern.permute.xlu0 2
    %553 = vperm.xlu0 %552, %v47
    %v554 = vpop.permute.xlu0 %553
    %556 = vset.pattern.permute.xlu0 2
    %557 = vperm.xlu0 %556, %v48
    %v558 = vpop.permute.xlu0 %557
    %560 = vset.pattern.permute.xlu0 2
    %561 = vperm.xlu0 %560, %v49
    %v562 = vpop.permute.xlu0 %561
    %564 = vset.pattern.permute.xlu0 2
    %565 = vperm.xlu0 %564, %v50
    %v566 = vpop.permute.xlu0 %565
    %v568 = vmul.f32 %v542, %v527
    %v569 = vmul.f32 %v546, %v529
    %v570 = vmul.f32 %v550, %v531
    %v571 = vmul.f32 %v554, %v533
    %v572 = vmul.f32 %v558, %v535
    %v573 = vmul.f32 %v562, %v537
    %v574 = vmul.f32 %v566, %v539
    %vm575 = vcmask 424960
    %v577 = vsel %vm575, %v362, 0
    %v580 = vsel %vm575, %v363, 0
    %v583 = vsel %vm575, %v364, 0
    %v586 = vsel %vm575, %v365, 0
    %v589 = vsel %vm575, %v366, 0
    %v592 = vsel %vm575, %v367, 0
    %v595 = vsel %vm575, %v368, 0
    %v598 = vsel %vm575, %v369, 0
    %v601 = vsel %vm575, %v370, 0
    %v604 = vsel %vm575, %v371, 0
    %v607 = vsel %vm575, %v372, 0
    %v610 = vsel %vm575, %v373, 0
    %v613 = vsel %vm575, %v374, 0
    %v616 = vsel %vm575, %v375, 0
    %v619 = vsel %vm575, %v376, 0
    %v622 = vsel %vm575, %v377, 0
    %vm624 = vcmask 1043456
    %v626 = vsel %vm624, %v57, 0
    %628 = vmatprep.subr.mxu0 0.0
    %629 = vmatpush1.msra.mxu0 0.0
    %630 = vmatprep.subr.mxu0 0.0
    %631 = vmatpush1.msra.mxu0 0.0
    %632 = vmatprep.subr.mxu0 0.0
    %633 = vmatpush1.msra.mxu0 0.0
    %634 = vmatprep.subr.mxu0 0.0
    %635 = vmatpush1.msra.mxu0 0.0
    %636 = vmatprep.subr.mxu0 0.0
    %637 = vmatpush1.msra.mxu0 0.0
    %638 = vmatprep.subr.mxu0 0.0
    %639 = vmatpush1.msra.mxu0 0.0
    %640 = vmatprep.subr.mxu0 0.0
    %641 = vmatpush1.msra.mxu0 0.0
    %642 = vmatprep.subr.mxu0 0.0
    %643 = vmatpush1.msra.mxu0 0.0
    %644 = vmatprep.subr.mxu0 0.0
    %645 = vmatpush1.msra.mxu0 0.0
    %646 = vmatprep.subr.mxu0 0.0
    %647 = vmatpush1.msra.mxu0 %v626
    %648 = vmatprep.subr.mxu0 0.0
    %649 = vmatpush1.msra.mxu0 %v56
    %650 = vmatprep.subr.mxu0 0.0
    %651 = vmatpush1.msra.mxu0 %v55
    %652 = vmatprep.subr.mxu0 0.0
    %653 = vmatpush1.msra.mxu0 %v54
    %654 = vmatprep.subr.mxu0 0.0
    %655 = vmatpush1.msra.mxu0 %v53
    %656 = vmatprep.subr.mxu0 0.0
    %657 = vmatpush1.msra.mxu0 %v52
    %658 = vmatprep.subr.mxu0 0.0
    %659 = vmatpush1.msra.mxu0 %v51
    %660 = vmatprep.subr.mxu0 0.0
    %661 = vmatpush2.msra.mxu0 0.0
    %662 = vmatprep.subr.mxu0 0.0
    %663 = vmatpush2.msra.mxu0 0.0
    %664 = vmatprep.subr.mxu0 0.0
    %665 = vmatpush2.msra.mxu0 0.0
    %666 = vmatprep.subr.mxu0 0.0
    %667 = vmatpush2.msra.mxu0 0.0
    %668 = vmatprep.subr.mxu0 0.0
    %669 = vmatpush2.msra.mxu0 0.0
    %670 = vmatprep.subr.mxu0 0.0
    %671 = vmatpush2.msra.mxu0 0.0
    %672 = vmatprep.subr.mxu0 0.0
    %673 = vmatpush2.msra.mxu0 0.0
    %674 = vmatprep.subr.mxu0 0.0
    %675 = vmatpush2.msra.mxu0 0.0
    %676 = vmatprep.subr.mxu0 0.0
    %677 = vmatpush2.msra.mxu0 0.0
    %678 = vmatprep.subr.mxu0 0.0
    %679 = vmatpush2.msra.mxu0 0.0
    %680 = vmatprep.subr.mxu0 0.0
    %681 = vmatpush2.msra.mxu0 0.0
    %682 = vmatprep.subr.mxu0 0.0
    %683 = vmatpush2.msra.mxu0 0.0
    %684 = vmatprep.subr.mxu0 0.0
    %685 = vmatpush2.msra.mxu0 0.0
    %686 = vmatprep.subr.mxu0 0.0
    %687 = vmatpush2.msra.mxu0 0.0
    %688 = vmatprep.subr.mxu0 0.0
    %689 = vmatpush2.msra.mxu0 0.0
    %690 = vmatprep.subr.mxu0 0.0
    %691 = vmatpush2.msra.mxu0 0.0
    %692 = vmatprep.mubr.f32.mxu0 0.0
    %693 = vmatmul.mubr.f32.gmra.mxu0 %v577
    %v694 = vpop.f32.mrf.mxu0
    %v695 = vadd.f32 0.0, %v694
    %v696 = vpop.f32.mrf.mxu0
    %697 = vmatprep.mubr.f32.mxu0 0.0
    %698 = vmatmul.mubr.f32.gmra.mxu0 %v580
    %v699 = vpop.f32.mrf.mxu0
    %v700 = vadd.f32 0.0, %v699
    %v701 = vpop.f32.mrf.mxu0
    %702 = vmatprep.mubr.f32.mxu0 0.0
    %703 = vmatmul.mubr.f32.gmra.mxu0 %v583
    %v704 = vpop.f32.mrf.mxu0
    %v705 = vadd.f32 0.0, %v704
    %v706 = vpop.f32.mrf.mxu0
    %707 = vmatprep.mubr.f32.mxu0 0.0
    %708 = vmatmul.mubr.f32.gmra.mxu0 %v586
    %v709 = vpop.f32.mrf.mxu0
    %v710 = vadd.f32 0.0, %v709
    %v711 = vpop.f32.mrf.mxu0
    %712 = vmatprep.mubr.f32.mxu0 0.0
    %713 = vmatmul.mubr.f32.gmra.mxu0 %v589
    %v714 = vpop.f32.mrf.mxu0
    %v715 = vadd.f32 0.0, %v714
    %v716 = vpop.f32.mrf.mxu0
    %717 = vmatprep.mubr.f32.mxu0 0.0
    %718 = vmatmul.mubr.f32.gmra.mxu0 %v592
    %v719 = vpop.f32.mrf.mxu0
    %v720 = vadd.f32 0.0, %v719
    %v721 = vpop.f32.mrf.mxu0
    %722 = vmatprep.mubr.f32.mxu0 0.0
    %723 = vmatmul.mubr.f32.gmra.mxu0 %v595
    %v724 = vpop.f32.mrf.mxu0
    %v725 = vadd.f32 0.0, %v724
    %v726 = vpop.f32.mrf.mxu0
    %727 = vmatprep.mubr.f32.mxu0 0.0
    %728 = vmatmul.mubr.f32.gmra.mxu0 %v598
    %v729 = vpop.f32.mrf.mxu0
    %v730 = vadd.f32 0.0, %v729
    %v731 = vpop.f32.mrf.mxu0
    %732 = vmatprep.mubr.f32.mxu0 0.0
    %733 = vmatmul.mubr.f32.gmra.mxu0 %v601
    %v734 = vpop.f32.mrf.mxu0
    %v735 = vadd.f32 0.0, %v734
    %v736 = vpop.f32.mrf.mxu0
    %737 = vmatprep.mubr.f32.mxu0 0.0
    %738 = vmatmul.mubr.f32.gmra.mxu0 %v604
    %v739 = vpop.f32.mrf.mxu0
    %v740 = vadd.f32 0.0, %v739
    %v741 = vpop.f32.mrf.mxu0
    %742 = vmatprep.mubr.f32.mxu0 0.0
    %743 = vmatmul.mubr.f32.gmra.mxu0 %v607
    %v744 = vpop.f32.mrf.mxu0
    %v745 = vadd.f32 0.0, %v744
    %v746 = vpop.f32.mrf.mxu0
    %747 = vmatprep.mubr.f32.mxu0 0.0
    %748 = vmatmul.mubr.f32.gmra.mxu0 %v610
    %v749 = vpop.f32.mrf.mxu0
    %v750 = vadd.f32 0.0, %v749
    %v751 = vpop.f32.mrf.mxu0
    %752 = vmatprep.mubr.f32.mxu0 0.0
    %753 = vmatmul.mubr.f32.gmra.mxu0 %v613
    %v754 = vpop.f32.mrf.mxu0
    %v755 = vadd.f32 0.0, %v754
    %v756 = vpop.f32.mrf.mxu0
    %757 = vmatprep.mubr.f32.mxu0 0.0
    %758 = vmatmul.mubr.f32.gmra.mxu0 %v616
    %v759 = vpop.f32.mrf.mxu0
    %v760 = vadd.f32 0.0, %v759
    %v761 = vpop.f32.mrf.mxu0
    %762 = vmatprep.mubr.f32.mxu0 0.0
    %763 = vmatmul.mubr.f32.gmra.mxu0 %v619
    %v764 = vpop.f32.mrf.mxu0
    %v765 = vadd.f32 0.0, %v764
    %v766 = vpop.f32.mrf.mxu0
    %767 = vmatprep.mubr.f32.mxu0 0.0
    %768 = vmatmul.mubr.f32.gmra.mxu0 %v622
    %v769 = vpop.f32.mrf.mxu0
    %v770 = vadd.f32 0.0, %v769
    %v771 = vpop.f32.mrf.mxu0
    %772 = vdwg.mxu0
    %v774 = vrot.slane %v43, 5
    %v775 = vsel %vm575, %v774, 0
    %v778 = vsel %vm624, %v574, 0
    %780 = vmatprep.subr.mxu0 0.0
    %781 = vmatpush1.msra.mxu0 0.0
    %782 = vmatprep.subr.mxu0 0.0
    %783 = vmatpush1.msra.mxu0 0.0
    %784 = vmatprep.subr.mxu0 0.0
    %785 = vmatpush1.msra.mxu0 0.0
    %786 = vmatprep.subr.mxu0 0.0
    %787 = vmatpush1.msra.mxu0 0.0
    %788 = vmatprep.subr.mxu0 0.0
    %789 = vmatpush1.msra.mxu0 0.0
    %790 = vmatprep.subr.mxu0 0.0
    %791 = vmatpush1.msra.mxu0 0.0
    %792 = vmatprep.subr.mxu0 0.0
    %793 = vmatpush1.msra.mxu0 0.0
    %794 = vmatprep.subr.mxu0 0.0
    %795 = vmatpush1.msra.mxu0 0.0
    %796 = vmatprep.subr.mxu0 0.0
    %797 = vmatpush1.msra.mxu0 0.0
    %798 = vmatprep.subr.mxu0 0.0
    %799 = vmatpush1.msra.mxu0 %v778
    %800 = vmatprep.subr.mxu0 0.0
    %801 = vmatpush1.msra.mxu0 %v573
    %802 = vmatprep.subr.mxu0 0.0
    %803 = vmatpush1.msra.mxu0 %v572
    %804 = vmatprep.subr.mxu0 0.0
    %805 = vmatpush1.msra.mxu0 %v571
    %806 = vmatprep.subr.mxu0 0.0
    %807 = vmatpush1.msra.mxu0 %v570
    %808 = vmatprep.subr.mxu0 0.0
    %809 = vmatpush1.msra.mxu0 %v569
    %810 = vmatprep.subr.mxu0 0.0
    %811 = vmatpush1.msra.mxu0 %v568
    %812 = vmatprep.subr.mxu0 0.0
    %813 = vmatpush2.msra.mxu0 0.0
    %814 = vmatprep.subr.mxu0 0.0
    %815 = vmatpush2.msra.mxu0 0.0
    %816 = vmatprep.subr.mxu0 0.0
    %817 = vmatpush2.msra.mxu0 0.0
    %818 = vmatprep.subr.mxu0 0.0
    %819 = vmatpush2.msra.mxu0 0.0
    %820 = vmatprep.subr.mxu0 0.0
    %821 = vmatpush2.msra.mxu0 0.0
    %822 = vmatprep.subr.mxu0 0.0
    %823 = vmatpush2.msra.mxu0 0.0
    %824 = vmatprep.subr.mxu0 0.0
    %825 = vmatpush2.msra.mxu0 0.0
    %826 = vmatprep.subr.mxu0 0.0
    %827 = vmatpush2.msra.mxu0 0.0
    %828 = vmatprep.subr.mxu0 0.0
    %829 = vmatpush2.msra.mxu0 0.0
    %830 = vmatprep.subr.mxu0 0.0
    %831 = vmatpush2.msra.mxu0 0.0
    %832 = vmatprep.subr.mxu0 0.0
    %833 = vmatpush2.msra.mxu0 0.0
    %834 = vmatprep.subr.mxu0 0.0
    %835 = vmatpush2.msra.mxu0 0.0
    %836 = vmatprep.subr.mxu0 0.0
    %837 = vmatpush2.msra.mxu0 0.0
    %838 = vmatprep.subr.mxu0 0.0
    %839 = vmatpush2.msra.mxu0 0.0
    %840 = vmatprep.subr.mxu0 0.0
    %841 = vmatpush2.msra.mxu0 0.0
    %842 = vmatprep.subr.mxu0 0.0
    %843 = vmatpush2.msra.mxu0 0.0
    %844 = vmatprep.mubr.f32.mxu0 0.0
    %845 = vmatmul.mubr.f32.gmra.mxu0 %v775
    %v846 = vpop.f32.mrf.mxu0
    %v847 = vadd.f32 0.0, %v846
    %v848 = vpop.f32.mrf.mxu0
    %849 = vdwg.mxu0
    %v850 = vlaneseq
    %v851 = vshrl.u32 %v850, 7
    %v852 = vsub.s32 4, %v851
    %v853 = vrot.slane %v43, %v852
    %v854 = vmul.f32 %v853, %v695
    %v855 = vmul.f32 %v853, %v700
    %v856 = vmul.f32 %v853, %v705
    %v857 = vmul.f32 %v853, %v710
    %v858 = vmul.f32 %v853, %v715
    %v859 = vmul.f32 %v853, %v720
    %v860 = vmul.f32 %v853, %v725
    %v861 = vmul.f32 %v853, %v730
    %v862 = vmul.f32 %v853, %v735
    %v863 = vmul.f32 %v853, %v740
    %v864 = vmul.f32 %v853, %v745
    %v865 = vmul.f32 %v853, %v750
    %v866 = vmul.f32 %v853, %v755
    %v867 = vmul.f32 %v853, %v760
    %v868 = vmul.f32 %v853, %v765
    %v869 = vmul.f32 %v853, %v770
    %v870 = vsub.f32 %v695, %v854
    %v871 = vsub.f32 %v700, %v855
    %v872 = vsub.f32 %v705, %v856
    %v873 = vsub.f32 %v710, %v857
    %v874 = vsub.f32 %v715, %v858
    %v875 = vsub.f32 %v720, %v859
    %v876 = vsub.f32 %v725, %v860
    %v877 = vsub.f32 %v730, %v861
    %v878 = vsub.f32 %v735, %v862
    %v879 = vsub.f32 %v740, %v863
    %v880 = vsub.f32 %v745, %v864
    %v881 = vsub.f32 %v750, %v865
    %v882 = vsub.f32 %v755, %v866
    %v883 = vsub.f32 %v760, %v867
    %v884 = vsub.f32 %v765, %v868
    %v885 = vsub.f32 %v770, %v869
    %v887 = vsel %vm575, %v854, 0
    %v890 = vsel %vm575, %v855, 0
    %v893 = vsel %vm575, %v856, 0
    %v896 = vsel %vm575, %v857, 0
    %v899 = vsel %vm575, %v858, 0
    %v902 = vsel %vm575, %v859, 0
    %v905 = vsel %vm575, %v860, 0
    %v908 = vsel %vm575, %v861, 0
    %v911 = vsel %vm575, %v862, 0
    %v914 = vsel %vm575, %v863, 0
    %v917 = vsel %vm575, %v864, 0
    %v920 = vsel %vm575, %v865, 0
    %v923 = vsel %vm575, %v866, 0
    %v926 = vsel %vm575, %v867, 0
    %v929 = vsel %vm575, %v868, 0
    %v932 = vsel %vm575, %v869, 0
    %934 = vmatprep.subr.mxu0 0.0
    %935 = vmatpush1.msra.mxu0 0.0
    %936 = vmatprep.subr.mxu0 0.0
    %937 = vmatpush1.msra.mxu0 0.0
    %938 = vmatprep.subr.mxu0 0.0
    %939 = vmatpush1.msra.mxu0 0.0
    %940 = vmatprep.subr.mxu0 0.0
    %941 = vmatpush1.msra.mxu0 0.0
    %942 = vmatprep.subr.mxu0 0.0
    %943 = vmatpush1.msra.mxu0 0.0
    %944 = vmatprep.subr.mxu0 0.0
    %945 = vmatpush1.msra.mxu0 0.0
    %946 = vmatprep.subr.mxu0 0.0
    %947 = vmatpush1.msra.mxu0 0.0
    %948 = vmatprep.subr.mxu0 0.0
    %949 = vmatpush1.msra.mxu0 0.0
    %950 = vmatprep.subr.mxu0 0.0
    %951 = vmatpush1.msra.mxu0 0.0
    %952 = vmatprep.subr.mxu0 0.0
    %953 = vmatpush1.msra.mxu0 %v778
    %954 = vmatprep.subr.mxu0 0.0
    %955 = vmatpush1.msra.mxu0 %v573
    %956 = vmatprep.subr.mxu0 0.0
    %957 = vmatpush1.msra.mxu0 %v572
    %958 = vmatprep.subr.mxu0 0.0
    %959 = vmatpush1.msra.mxu0 %v571
    %960 = vmatprep.subr.mxu0 0.0
    %961 = vmatpush1.msra.mxu0 %v570
    %962 = vmatprep.subr.mxu0 0.0
    %963 = vmatpush1.msra.mxu0 %v569
    %964 = vmatprep.subr.mxu0 0.0
    %965 = vmatpush1.msra.mxu0 %v568
    %966 = vmatprep.subr.mxu0 0.0
    %967 = vmatpush2.msra.mxu0 0.0
    %968 = vmatprep.subr.mxu0 0.0
    %969 = vmatpush2.msra.mxu0 0.0
    %970 = vmatprep.subr.mxu0 0.0
    %971 = vmatpush2.msra.mxu0 0.0
    %972 = vmatprep.subr.mxu0 0.0
    %973 = vmatpush2.msra.mxu0 0.0
    %974 = vmatprep.subr.mxu0 0.0
    %975 = vmatpush2.msra.mxu0 0.0
    %976 = vmatprep.subr.mxu0 0.0
    %977 = vmatpush2.msra.mxu0 0.0
    %978 = vmatprep.subr.mxu0 0.0
    %979 = vmatpush2.msra.mxu0 0.0
    %980 = vmatprep.subr.mxu0 0.0
    %981 = vmatpush2.msra.mxu0 0.0
    %982 = vmatprep.subr.mxu0 0.0
    %983 = vmatpush2.msra.mxu0 0.0
    %984 = vmatprep.subr.mxu0 0.0
    %985 = vmatpush2.msra.mxu0 0.0
    %986 = vmatprep.subr.mxu0 0.0
    %987 = vmatpush2.msra.mxu0 0.0
    %988 = vmatprep.subr.mxu0 0.0
    %989 = vmatpush2.msra.mxu0 0.0
    %990 = vmatprep.subr.mxu0 0.0
    %991 = vmatpush2.msra.mxu0 0.0
    %992 = vmatprep.subr.mxu0 0.0
    %993 = vmatpush2.msra.mxu0 0.0
    %994 = vmatprep.subr.mxu0 0.0
    %995 = vmatpush2.msra.mxu0 0.0
    %996 = vmatprep.subr.mxu0 0.0
    %997 = vmatpush2.msra.mxu0 0.0
    %998 = vmatprep.mubr.f32.mxu0 0.0
    %999 = vmatmul.mubr.f32.gmra.mxu0 %v887
    %v1000 = vpop.f32.mrf.mxu0
    %v1001 = vadd.f32 0.0, %v1000
    %v1002 = vpop.f32.mrf.mxu0
    %1003 = vmatprep.mubr.f32.mxu0 0.0
    %1004 = vmatmul.mubr.f32.gmra.mxu0 %v890
    %v1005 = vpop.f32.mrf.mxu0
    %v1006 = vadd.f32 0.0, %v1005
    %v1007 = vpop.f32.mrf.mxu0
    %1008 = vmatprep.mubr.f32.mxu0 0.0
    %1009 = vmatmul.mubr.f32.gmra.mxu0 %v893
    %v1010 = vpop.f32.mrf.mxu0
    %v1011 = vadd.f32 0.0, %v1010
    %v1012 = vpop.f32.mrf.mxu0
    %1013 = vmatprep.mubr.f32.mxu0 0.0
    %1014 = vmatmul.mubr.f32.gmra.mxu0 %v896
    %v1015 = vpop.f32.mrf.mxu0
    %v1016 = vadd.f32 0.0, %v1015
    %v1017 = vpop.f32.mrf.mxu0
    %1018 = vmatprep.mubr.f32.mxu0 0.0
    %1019 = vmatmul.mubr.f32.gmra.mxu0 %v899
    %v1020 = vpop.f32.mrf.mxu0
    %v1021 = vadd.f32 0.0, %v1020
    %v1022 = vpop.f32.mrf.mxu0
    %1023 = vmatprep.mubr.f32.mxu0 0.0
    %1024 = vmatmul.mubr.f32.gmra.mxu0 %v902
    %v1025 = vpop.f32.mrf.mxu0
    %v1026 = vadd.f32 0.0, %v1025
    %v1027 = vpop.f32.mrf.mxu0
    %1028 = vmatprep.mubr.f32.mxu0 0.0
    %1029 = vmatmul.mubr.f32.gmra.mxu0 %v905
    %v1030 = vpop.f32.mrf.mxu0
    %v1031 = vadd.f32 0.0, %v1030
    %v1032 = vpop.f32.mrf.mxu0
    %1033 = vmatprep.mubr.f32.mxu0 0.0
    %1034 = vmatmul.mubr.f32.gmra.mxu0 %v908
    %v1035 = vpop.f32.mrf.mxu0
    %v1036 = vadd.f32 0.0, %v1035
    %v1037 = vpop.f32.mrf.mxu0
    %1038 = vmatprep.mubr.f32.mxu0 0.0
    %1039 = vmatmul.mubr.f32.gmra.mxu0 %v911
    %v1040 = vpop.f32.mrf.mxu0
    %v1041 = vadd.f32 0.0, %v1040
    %v1042 = vpop.f32.mrf.mxu0
    %1043 = vmatprep.mubr.f32.mxu0 0.0
    %1044 = vmatmul.mubr.f32.gmra.mxu0 %v914
    %v1045 = vpop.f32.mrf.mxu0
    %v1046 = vadd.f32 0.0, %v1045
    %v1047 = vpop.f32.mrf.mxu0
    %1048 = vmatprep.mubr.f32.mxu0 0.0
    %1049 = vmatmul.mubr.f32.gmra.mxu0 %v917
    %v1050 = vpop.f32.mrf.mxu0
    %v1051 = vadd.f32 0.0, %v1050
    %v1052 = vpop.f32.mrf.mxu0
    %1053 = vmatprep.mubr.f32.mxu0 0.0
    %1054 = vmatmul.mubr.f32.gmra.mxu0 %v920
    %v1055 = vpop.f32.mrf.mxu0
    %v1056 = vadd.f32 0.0, %v1055
    %v1057 = vpop.f32.mrf.mxu0
    %1058 = vmatprep.mubr.f32.mxu0 0.0
    %1059 = vmatmul.mubr.f32.gmra.mxu0 %v923
    %v1060 = vpop.f32.mrf.mxu0
    %v1061 = vadd.f32 0.0, %v1060
    %v1062 = vpop.f32.mrf.mxu0
    %1063 = vmatprep.mubr.f32.mxu0 0.0
    %1064 = vmatmul.mubr.f32.gmra.mxu0 %v926
    %v1065 = vpop.f32.mrf.mxu0
    %v1066 = vadd.f32 0.0, %v1065
    %v1067 = vpop.f32.mrf.mxu0
    %1068 = vmatprep.mubr.f32.mxu0 0.0
    %1069 = vmatmul.mubr.f32.gmra.mxu0 %v929
    %v1070 = vpop.f32.mrf.mxu0
    %v1071 = vadd.f32 0.0, %v1070
    %v1072 = vpop.f32.mrf.mxu0
    %1073 = vmatprep.mubr.f32.mxu0 0.0
    %1074 = vmatmul.mubr.f32.gmra.mxu0 %v932
    %v1075 = vpop.f32.mrf.mxu0
    %v1076 = vadd.f32 0.0, %v1075
    %v1077 = vpop.f32.mrf.mxu0
    %1078 = vdwg.mxu0
    %v1080 = vsel %vm575, %v870, 0
    %v1083 = vsel %vm575, %v871, 0
    %v1086 = vsel %vm575, %v872, 0
    %v1089 = vsel %vm575, %v873, 0
    %v1092 = vsel %vm575, %v874, 0
    %v1095 = vsel %vm575, %v875, 0
    %v1098 = vsel %vm575, %v876, 0
    %v1101 = vsel %vm575, %v877, 0
    %v1104 = vsel %vm575, %v878, 0
    %v1107 = vsel %vm575, %v879, 0
    %v1110 = vsel %vm575, %v880, 0
    %v1113 = vsel %vm575, %v881, 0
    %v1116 = vsel %vm575, %v882, 0
    %v1119 = vsel %vm575, %v883, 0
    %v1122 = vsel %vm575, %v884, 0
    %v1125 = vsel %vm575, %v885, 0
    %1127 = vmatprep.subr.mxu0 0.0
    %1128 = vmatpush1.msra.mxu0 0.0
    %1129 = vmatprep.subr.mxu0 0.0
    %1130 = vmatpush1.msra.mxu0 0.0
    %1131 = vmatprep.subr.mxu0 0.0
    %1132 = vmatpush1.msra.mxu0 0.0
    %1133 = vmatprep.subr.mxu0 0.0
    %1134 = vmatpush1.msra.mxu0 0.0
    %1135 = vmatprep.subr.mxu0 0.0
    %1136 = vmatpush1.msra.mxu0 0.0
    %1137 = vmatprep.subr.mxu0 0.0
    %1138 = vmatpush1.msra.mxu0 0.0
    %1139 = vmatprep.subr.mxu0 0.0
    %1140 = vmatpush1.msra.mxu0 0.0
    %1141 = vmatprep.subr.mxu0 0.0
    %1142 = vmatpush1.msra.mxu0 0.0
    %1143 = vmatprep.subr.mxu0 0.0
    %1144 = vmatpush1.msra.mxu0 0.0
    %1145 = vmatprep.subr.mxu0 0.0
    %1146 = vmatpush1.msra.mxu0 %v778
    %1147 = vmatprep.subr.mxu0 0.0
    %1148 = vmatpush1.msra.mxu0 %v573
    %1149 = vmatprep.subr.mxu0 0.0
    %1150 = vmatpush1.msra.mxu0 %v572
    %1151 = vmatprep.subr.mxu0 0.0
    %1152 = vmatpush1.msra.mxu0 %v571
    %1153 = vmatprep.subr.mxu0 0.0
    %1154 = vmatpush1.msra.mxu0 %v570
    %1155 = vmatprep.subr.mxu0 0.0
    %1156 = vmatpush1.msra.mxu0 %v569
    %1157 = vmatprep.subr.mxu0 0.0
    %1158 = vmatpush1.msra.mxu0 %v568
    %1159 = vmatprep.subr.mxu0 0.0
    %1160 = vmatpush2.msra.mxu0 0.0
    %1161 = vmatprep.subr.mxu0 0.0
    %1162 = vmatpush2.msra.mxu0 0.0
    %1163 = vmatprep.subr.mxu0 0.0
    %1164 = vmatpush2.msra.mxu0 0.0
    %1165 = vmatprep.subr.mxu0 0.0
    %1166 = vmatpush2.msra.mxu0 0.0
    %1167 = vmatprep.subr.mxu0 0.0
    %1168 = vmatpush2.msra.mxu0 0.0
    %1169 = vmatprep.subr.mxu0 0.0
    %1170 = vmatpush2.msra.mxu0 0.0
    %1171 = vmatprep.subr.mxu0 0.0
    %1172 = vmatpush2.msra.mxu0 0.0
    %1173 = vmatprep.subr.mxu0 0.0
    %1174 = vmatpush2.msra.mxu0 0.0
    %1175 = vmatprep.subr.mxu0 0.0
    %1176 = vmatpush2.msra.mxu0 0.0
    %1177 = vmatprep.subr.mxu0 0.0
    %1178 = vmatpush2.msra.mxu0 0.0
    %1179 = vmatprep.subr.mxu0 0.0
    %1180 = vmatpush2.msra.mxu0 0.0
    %1181 = vmatprep.subr.mxu0 0.0
    %1182 = vmatpush2.msra.mxu0 0.0
    %1183 = vmatprep.subr.mxu0 0.0
    %1184 = vmatpush2.msra.mxu0 0.0
    %1185 = vmatprep.subr.mxu0 0.0
    %1186 = vmatpush2.msra.mxu0 0.0
    %1187 = vmatprep.subr.mxu0 0.0
    %1188 = vmatpush2.msra.mxu0 0.0
    %1189 = vmatprep.subr.mxu0 0.0
    %1190 = vmatpush2.msra.mxu0 0.0
    %1191 = vmatprep.mubr.f32.mxu0 0.0
    %1192 = vmatmul.mubr.f32.gmra.mxu0 %v1080
    %v1193 = vpop.f32.mrf.mxu0
    %v1194 = vadd.f32 0.0, %v1193
    %v1195 = vpop.f32.mrf.mxu0
    %1196 = vmatprep.mubr.f32.mxu0 0.0
    %1197 = vmatmul.mubr.f32.gmra.mxu0 %v1083
    %v1198 = vpop.f32.mrf.mxu0
    %v1199 = vadd.f32 0.0, %v1198
    %v1200 = vpop.f32.mrf.mxu0
    %1201 = vmatprep.mubr.f32.mxu0 0.0
    %1202 = vmatmul.mubr.f32.gmra.mxu0 %v1086
    %v1203 = vpop.f32.mrf.mxu0
    %v1204 = vadd.f32 0.0, %v1203
    %v1205 = vpop.f32.mrf.mxu0
    %1206 = vmatprep.mubr.f32.mxu0 0.0
    %1207 = vmatmul.mubr.f32.gmra.mxu0 %v1089
    %v1208 = vpop.f32.mrf.mxu0
    %v1209 = vadd.f32 0.0, %v1208
    %v1210 = vpop.f32.mrf.mxu0
    %1211 = vmatprep.mubr.f32.mxu0 0.0
    %1212 = vmatmul.mubr.f32.gmra.mxu0 %v1092
    %v1213 = vpop.f32.mrf.mxu0
    %v1214 = vadd.f32 0.0, %v1213
    %v1215 = vpop.f32.mrf.mxu0
    %1216 = vmatprep.mubr.f32.mxu0 0.0
    %1217 = vmatmul.mubr.f32.gmra.mxu0 %v1095
    %v1218 = vpop.f32.mrf.mxu0
    %v1219 = vadd.f32 0.0, %v1218
    %v1220 = vpop.f32.mrf.mxu0
    %1221 = vmatprep.mubr.f32.mxu0 0.0
    %1222 = vmatmul.mubr.f32.gmra.mxu0 %v1098
    %v1223 = vpop.f32.mrf.mxu0
    %v1224 = vadd.f32 0.0, %v1223
    %v1225 = vpop.f32.mrf.mxu0
    %1226 = vmatprep.mubr.f32.mxu0 0.0
    %1227 = vmatmul.mubr.f32.gmra.mxu0 %v1101
    %v1228 = vpop.f32.mrf.mxu0
    %v1229 = vadd.f32 0.0, %v1228
    %v1230 = vpop.f32.mrf.mxu0
    %1231 = vmatprep.mubr.f32.mxu0 0.0
    %1232 = vmatmul.mubr.f32.gmra.mxu0 %v1104
    %v1233 = vpop.f32.mrf.mxu0
    %v1234 = vadd.f32 0.0, %v1233
    %v1235 = vpop.f32.mrf.mxu0
    %1236 = vmatprep.mubr.f32.mxu0 0.0
    %1237 = vmatmul.mubr.f32.gmra.mxu0 %v1107
    %v1238 = vpop.f32.mrf.mxu0
    %v1239 = vadd.f32 0.0, %v1238
    %v1240 = vpop.f32.mrf.mxu0
    %1241 = vmatprep.mubr.f32.mxu0 0.0
    %1242 = vmatmul.mubr.f32.gmra.mxu0 %v1110
    %v1243 = vpop.f32.mrf.mxu0
    %v1244 = vadd.f32 0.0, %v1243
    %v1245 = vpop.f32.mrf.mxu0
    %1246 = vmatprep.mubr.f32.mxu0 0.0
    %1247 = vmatmul.mubr.f32.gmra.mxu0 %v1113
    %v1248 = vpop.f32.mrf.mxu0
    %v1249 = vadd.f32 0.0, %v1248
    %v1250 = vpop.f32.mrf.mxu0
    %1251 = vmatprep.mubr.f32.mxu0 0.0
    %1252 = vmatmul.mubr.f32.gmra.mxu0 %v1116
    %v1253 = vpop.f32.mrf.mxu0
    %v1254 = vadd.f32 0.0, %v1253
    %v1255 = vpop.f32.mrf.mxu0
    %1256 = vmatprep.mubr.f32.mxu0 0.0
    %1257 = vmatmul.mubr.f32.gmra.mxu0 %v1119
    %v1258 = vpop.f32.mrf.mxu0
    %v1259 = vadd.f32 0.0, %v1258
    %v1260 = vpop.f32.mrf.mxu0
    %1261 = vmatprep.mubr.f32.mxu0 0.0
    %1262 = vmatmul.mubr.f32.gmra.mxu0 %v1122
    %v1263 = vpop.f32.mrf.mxu0
    %v1264 = vadd.f32 0.0, %v1263
    %v1265 = vpop.f32.mrf.mxu0
    %1266 = vmatprep.mubr.f32.mxu0 0.0
    %1267 = vmatmul.mubr.f32.gmra.mxu0 %v1125
    %v1268 = vpop.f32.mrf.mxu0
    %v1269 = vadd.f32 0.0, %v1268
    %v1270 = vpop.f32.mrf.mxu0
    %1271 = vdwg.mxu0
    %v1272 = vsub.f32 %v61, %v416
    %v1273 = vsub.f32 %v66, %v416
    %v1274 = vsub.f32 %v71, %v416
    %v1275 = vsub.f32 %v76, %v416
    %v1276 = vsub.f32 %v81, %v416
    %v1277 = vsub.f32 %v86, %v416
    %v1278 = vsub.f32 %v91, %v416
    %v1279 = vsub.f32 %v96, %v416
    %v1280 = vsub.f32 %v101, %v416
    %v1281 = vsub.f32 %v106, %v416
    %v1282 = vsub.f32 %v111, %v416
    %v1283 = vsub.f32 %v116, %v416
    %v1284 = vsub.f32 %v121, %v416
    %v1285 = vsub.f32 %v126, %v416
    %v1286 = vsub.f32 %v131, %v416
    %v1287 = vsub.f32 %v136, %v416
    %v1288 = vmul.f32 %v1272, %v1272
    %v1289 = vmul.f32 %v1273, %v1273
    %v1290 = vmul.f32 %v1274, %v1274
    %v1291 = vmul.f32 %v1275, %v1275
    %v1292 = vmul.f32 %v1276, %v1276
    %v1293 = vmul.f32 %v1277, %v1277
    %v1294 = vmul.f32 %v1278, %v1278
    %v1295 = vmul.f32 %v1279, %v1279
    %v1296 = vmul.f32 %v1280, %v1280
    %v1297 = vmul.f32 %v1281, %v1281
    %v1298 = vmul.f32 %v1282, %v1282
    %v1299 = vmul.f32 %v1283, %v1283
    %v1300 = vmul.f32 %v1284, %v1284
    %v1301 = vmul.f32 %v1285, %v1285
    %v1302 = vmul.f32 %v1286, %v1286
    %v1303 = vmul.f32 %v1287, %v1287
    %v1304 = vsub.f32 %v176, %v462
    %v1305 = vsub.f32 %v180, %v462
    %v1306 = vsub.f32 %v184, %v462
    %v1307 = vsub.f32 %v188, %v462
    %v1308 = vsub.f32 %v192, %v462
    %v1309 = vsub.f32 %v196, %v462
    %v1310 = vsub.f32 %v200, %v462
    %v1311 = vsub.f32 %v204, %v462
    %v1312 = vsub.f32 %v208, %v462
    %v1313 = vsub.f32 %v212, %v462
    %v1314 = vsub.f32 %v216, %v462
    %v1315 = vsub.f32 %v220, %v462
    %v1316 = vsub.f32 %v224, %v462
    %v1317 = vsub.f32 %v228, %v462
    %v1318 = vsub.f32 %v232, %v462
    %v1319 = vsub.f32 %v236, %v462
    %v1320 = vmul.f32 %v1304, %v1304
    %v1321 = vmul.f32 %v1305, %v1305
    %v1322 = vmul.f32 %v1306, %v1306
    %v1323 = vmul.f32 %v1307, %v1307
    %v1324 = vmul.f32 %v1308, %v1308
    %v1325 = vmul.f32 %v1309, %v1309
    %v1326 = vmul.f32 %v1310, %v1310
    %v1327 = vmul.f32 %v1311, %v1311
    %v1328 = vmul.f32 %v1312, %v1312
    %v1329 = vmul.f32 %v1313, %v1313
    %v1330 = vmul.f32 %v1314, %v1314
    %v1331 = vmul.f32 %v1315, %v1315
    %v1332 = vmul.f32 %v1316, %v1316
    %v1333 = vmul.f32 %v1317, %v1317
    %v1334 = vmul.f32 %v1318, %v1318
    %v1335 = vmul.f32 %v1319, %v1319
    %v1336 = vadd.f32 %v1288, %v1320
    %v1337 = vadd.f32 %v1289, %v1321
    %v1338 = vadd.f32 %v1290, %v1322
    %v1339 = vadd.f32 %v1291, %v1323
    %v1340 = vadd.f32 %v1292, %v1324
    %v1341 = vadd.f32 %v1293, %v1325
    %v1342 = vadd.f32 %v1294, %v1326
    %v1343 = vadd.f32 %v1295, %v1327
    %v1344 = vadd.f32 %v1296, %v1328
    %v1345 = vadd.f32 %v1297, %v1329
    %v1346 = vadd.f32 %v1298, %v1330
    %v1347 = vadd.f32 %v1299, %v1331
    %v1348 = vadd.f32 %v1300, %v1332
    %v1349 = vadd.f32 %v1301, %v1333
    %v1350 = vadd.f32 %v1302, %v1334
    %v1351 = vadd.f32 %v1303, %v1335
    %s1352 = smul.u32 0, 128
    %v1353 = vlaneseq
    %v1354 = vshrl.u32 %v1353, 7
    %v1355 = vadd.s32 %v1354, 8
    %v1356 = vadd.s32 %v1354, 16
    %v1357 = vadd.s32 %v1354, 24
    %v1358 = vadd.s32 %v1354, 32
    %v1359 = vadd.s32 %v1354, 40
    %v1360 = vadd.s32 %v1354, 48
    %v1361 = vadd.s32 %v1354, 56
    %v1362 = vadd.s32 %v1354, 64
    %v1363 = vadd.s32 %v1354, 72
    %v1364 = vadd.s32 %v1354, 80
    %v1365 = vadd.s32 %v1354, 88
    %v1366 = vadd.s32 %v1354, 96
    %v1367 = vadd.s32 %v1354, 104
    %v1368 = vadd.s32 %v1354, 112
    %v1369 = vadd.s32 %v1354, 120
    %v1370 = vstv %s1352
    %v1371 = vadd.s32 %v1370, %v1354
    %v1372 = vadd.s32 %v1370, %v1355
    %v1373 = vadd.s32 %v1370, %v1356
    %v1374 = vadd.s32 %v1370, %v1357
    %v1375 = vadd.s32 %v1370, %v1358
    %v1376 = vadd.s32 %v1370, %v1359
    %v1377 = vadd.s32 %v1370, %v1360
    %v1378 = vadd.s32 %v1370, %v1361
    %v1379 = vadd.s32 %v1370, %v1362
    %v1380 = vadd.s32 %v1370, %v1363
    %v1381 = vadd.s32 %v1370, %v1364
    %v1382 = vadd.s32 %v1370, %v1365
    %v1383 = vadd.s32 %v1370, %v1366
    %v1384 = vadd.s32 %v1370, %v1367
    %v1385 = vadd.s32 %v1370, %v1368
    %v1386 = vadd.s32 %v1370, %v1369
    %v1387 = vlaneseq
    %v1388 = vand.u32 %v1387, 127
    %vm1389 = vcmp.eq.s32.totalorder %v1371, %v1388
    %vm1390 = vcmp.eq.s32.totalorder %v1372, %v1388
    %vm1391 = vcmp.eq.s32.totalorder %v1373, %v1388
    %vm1392 = vcmp.eq.s32.totalorder %v1374, %v1388
    %vm1393 = vcmp.eq.s32.totalorder %v1375, %v1388
    %vm1394 = vcmp.eq.s32.totalorder %v1376, %v1388
    %vm1395 = vcmp.eq.s32.totalorder %v1377, %v1388
    %vm1396 = vcmp.eq.s32.totalorder %v1378, %v1388
    %vm1397 = vcmp.eq.s32.totalorder %v1379, %v1388
    %vm1398 = vcmp.eq.s32.totalorder %v1380, %v1388
    %vm1399 = vcmp.eq.s32.totalorder %v1381, %v1388
    %vm1400 = vcmp.eq.s32.totalorder %v1382, %v1388
    %vm1401 = vcmp.eq.s32.totalorder %v1383, %v1388
    %vm1402 = vcmp.eq.s32.totalorder %v1384, %v1388
    %vm1403 = vcmp.eq.s32.totalorder %v1385, %v1388
    %vm1404 = vcmp.eq.s32.totalorder %v1386, %v1388
    %v1405 = vsel %vm1389, 1e-06, 0.0
    %v1406 = vsel %vm1390, 1e-06, 0.0
    %v1407 = vsel %vm1391, 1e-06, 0.0
    %v1408 = vsel %vm1392, 1e-06, 0.0
    %v1409 = vsel %vm1393, 1e-06, 0.0
    %v1410 = vsel %vm1394, 1e-06, 0.0
    %v1411 = vsel %vm1395, 1e-06, 0.0
    %v1412 = vsel %vm1396, 1e-06, 0.0
    %v1413 = vsel %vm1397, 1e-06, 0.0
    %v1414 = vsel %vm1398, 1e-06, 0.0
    %v1415 = vsel %vm1399, 1e-06, 0.0
    %v1416 = vsel %vm1400, 1e-06, 0.0
    %v1417 = vsel %vm1401, 1e-06, 0.0
    %v1418 = vsel %vm1402, 1e-06, 0.0
    %v1419 = vsel %vm1403, 1e-06, 0.0
    %v1420 = vsel %vm1404, 1e-06, 0.0
    %v1421 = vsub.f32 0.0, %v1336
    %v1422 = vsub.f32 0.0, %v1337
    %v1423 = vsub.f32 0.0, %v1338
    %v1424 = vsub.f32 0.0, %v1339
    %v1425 = vsub.f32 0.0, %v1340
    %v1426 = vsub.f32 0.0, %v1341
    %v1427 = vsub.f32 0.0, %v1342
    %v1428 = vsub.f32 0.0, %v1343
    %v1429 = vsub.f32 0.0, %v1344
    %v1430 = vsub.f32 0.0, %v1345
    %v1431 = vsub.f32 0.0, %v1346
    %v1432 = vsub.f32 0.0, %v1347
    %v1433 = vsub.f32 0.0, %v1348
    %v1434 = vsub.f32 0.0, %v1349
    %v1435 = vsub.f32 0.0, %v1350
    %v1436 = vsub.f32 0.0, %v1351
    %v1437 = vmul.f32 %v1421, 1.0406845
    %v1438 = vmul.f32 %v1422, 1.0406845
    %v1439 = vmul.f32 %v1423, 1.0406845
    %v1440 = vmul.f32 %v1424, 1.0406845
    %v1441 = vmul.f32 %v1425, 1.0406845
    %v1442 = vmul.f32 %v1426, 1.0406845
    %v1443 = vmul.f32 %v1427, 1.0406845
    %v1444 = vmul.f32 %v1428, 1.0406845
    %v1445 = vmul.f32 %v1429, 1.0406845
    %v1446 = vmul.f32 %v1430, 1.0406845
    %v1447 = vmul.f32 %v1431, 1.0406845
    %v1448 = vmul.f32 %v1432, 1.0406845
    %v1449 = vmul.f32 %v1433, 1.0406845
    %v1450 = vmul.f32 %v1434, 1.0406845
    %v1451 = vmul.f32 %v1435, 1.0406845
    %v1452 = vmul.f32 %v1436, 1.0406845
    %v1453 = vmul.f32 %v1437, 1.442695
    %v1454 = vpow.pop %v1453
    %v1455 = vmul.f32 %v1438, 1.442695
    %v1456 = vpow.pop %v1455
    %v1457 = vmul.f32 %v1439, 1.442695
    %v1458 = vpow.pop %v1457
    %v1459 = vmul.f32 %v1440, 1.442695
    %v1460 = vpow.pop %v1459
    %v1461 = vmul.f32 %v1441, 1.442695
    %v1462 = vpow.pop %v1461
    %v1463 = vmul.f32 %v1442, 1.442695
    %v1464 = vpow.pop %v1463
    %v1465 = vmul.f32 %v1443, 1.442695
    %v1466 = vpow.pop %v1465
    %v1467 = vmul.f32 %v1444, 1.442695
    %v1468 = vpow.pop %v1467
    %v1469 = vmul.f32 %v1445, 1.442695
    %v1470 = vpow.pop %v1469
    %v1471 = vmul.f32 %v1446, 1.442695
    %v1472 = vpow.pop %v1471
    %v1473 = vmul.f32 %v1447, 1.442695
    %v1474 = vpow.pop %v1473
    %v1475 = vmul.f32 %v1448, 1.442695
    %v1476 = vpow.pop %v1475
    %v1477 = vmul.f32 %v1449, 1.442695
    %v1478 = vpow.pop %v1477
    %v1479 = vmul.f32 %v1450, 1.442695
    %v1480 = vpow.pop %v1479
    %v1481 = vmul.f32 %v1451, 1.442695
    %v1482 = vpow.pop %v1481
    %v1483 = vmul.f32 %v1452, 1.442695
    %v1484 = vpow.pop %v1483
    %v1485 = vmul.f32 %v1454, 0.6931472
    %v1486 = vmul.f32 %v1456, 0.6931472
    %v1487 = vmul.f32 %v1458, 0.6931472
    %v1488 = vmul.f32 %v1460, 0.6931472
    %v1489 = vmul.f32 %v1462, 0.6931472
    %v1490 = vmul.f32 %v1464, 0.6931472
    %v1491 = vmul.f32 %v1466, 0.6931472
    %v1492 = vmul.f32 %v1468, 0.6931472
    %v1493 = vmul.f32 %v1470, 0.6931472
    %v1494 = vmul.f32 %v1472, 0.6931472
    %v1495 = vmul.f32 %v1474, 0.6931472
    %v1496 = vmul.f32 %v1476, 0.6931472
    %v1497 = vmul.f32 %v1478, 0.6931472
    %v1498 = vmul.f32 %v1480, 0.6931472
    %v1499 = vmul.f32 %v1482, 0.6931472
    %v1500 = vmul.f32 %v1484, 0.6931472
    %v1501 = vadd.f32 %v1485, %v1405
    %v1502 = vadd.f32 %v1486, %v1406
    %v1503 = vadd.f32 %v1487, %v1407
    %v1504 = vadd.f32 %v1488, %v1408
    %v1505 = vadd.f32 %v1489, %v1409
    %v1506 = vadd.f32 %v1490, %v1410
    %v1507 = vadd.f32 %v1491, %v1411
    %v1508 = vadd.f32 %v1492, %v1412
    %v1509 = vadd.f32 %v1493, %v1413
    %v1510 = vadd.f32 %v1494, %v1414
    %v1511 = vadd.f32 %v1495, %v1415
    %v1512 = vadd.f32 %v1496, %v1416
    %v1513 = vadd.f32 %v1497, %v1417
    %v1514 = vadd.f32 %v1498, %v1418
    %v1515 = vadd.f32 %v1499, %v1419
    %v1516 = vadd.f32 %v1500, %v1420
    %v1517 = vadd.f32 %v1501, %v1001
    %v1518 = vadd.f32 %v1502, %v1006
    %v1519 = vadd.f32 %v1503, %v1011
    %v1520 = vadd.f32 %v1504, %v1016
    %v1521 = vadd.f32 %v1505, %v1021
    %v1522 = vadd.f32 %v1506, %v1026
    %v1523 = vadd.f32 %v1507, %v1031
    %v1524 = vadd.f32 %v1508, %v1036
    %v1525 = vadd.f32 %v1509, %v1041
    %v1526 = vadd.f32 %v1510, %v1046
    %v1527 = vadd.f32 %v1511, %v1051
    %v1528 = vadd.f32 %v1512, %v1056
    %v1529 = vadd.f32 %v1513, %v1061
    %v1530 = vadd.f32 %v1514, %v1066
    %v1531 = vadd.f32 %v1515, %v1071
    %v1532 = vadd.f32 %v1516, %v1076
    %v1533 = vadd.f32 %v1501, %v1194
    %v1534 = vadd.f32 %v1502, %v1199
    %v1535 = vadd.f32 %v1503, %v1204
    %v1536 = vadd.f32 %v1504, %v1209
    %v1537 = vadd.f32 %v1505, %v1214
    %v1538 = vadd.f32 %v1506, %v1219
    %v1539 = vadd.f32 %v1507, %v1224
    %v1540 = vadd.f32 %v1508, %v1229
    %v1541 = vadd.f32 %v1509, %v1234
    %v1542 = vadd.f32 %v1510, %v1239
    %v1543 = vadd.f32 %v1511, %v1244
    %v1544 = vadd.f32 %v1512, %v1249
    %v1545 = vadd.f32 %v1513, %v1254
    %v1546 = vadd.f32 %v1514, %v1259
    %v1547 = vadd.f32 %v1515, %v1264
    %v1548 = vadd.f32 %v1516, %v1269
    %v1549 = vmul.f32 %v695, 0.5
    %v1550 = vmul.f32 %v700, 0.5
    %v1551 = vmul.f32 %v705, 0.5
    %v1552 = vmul.f32 %v710, 0.5
    %v1553 = vmul.f32 %v715, 0.5
    %v1554 = vmul.f32 %v720, 0.5
    %v1555 = vmul.f32 %v725, 0.5
    %v1556 = vmul.f32 %v730, 0.5
    %v1557 = vmul.f32 %v735, 0.5
    %v1558 = vmul.f32 %v740, 0.5
    %v1559 = vmul.f32 %v745, 0.5
    %v1560 = vmul.f32 %v750, 0.5
    %v1561 = vmul.f32 %v755, 0.5
    %v1562 = vmul.f32 %v760, 0.5
    %v1563 = vmul.f32 %v765, 0.5
    %v1564 = vmul.f32 %v770, 0.5
    %v1565 = vmul.f32 %v1549, %v695
    %v1566 = vmul.f32 %v1550, %v700
    %v1567 = vmul.f32 %v1551, %v705
    %v1568 = vmul.f32 %v1552, %v710
    %v1569 = vmul.f32 %v1553, %v715
    %v1570 = vmul.f32 %v1554, %v720
    %v1571 = vmul.f32 %v1555, %v725
    %v1572 = vmul.f32 %v1556, %v730
    %v1573 = vmul.f32 %v1557, %v735
    %v1574 = vmul.f32 %v1558, %v740
    %v1575 = vmul.f32 %v1559, %v745
    %v1576 = vmul.f32 %v1560, %v750
    %v1577 = vmul.f32 %v1561, %v755
    %v1578 = vmul.f32 %v1562, %v760
    %v1579 = vmul.f32 %v1563, %v765
    %v1580 = vmul.f32 %v1564, %v770
    %v1581 = vadd.f32 %v1565, 1.0
    %v1582 = vadd.f32 %v1566, 1.0
    %v1583 = vadd.f32 %v1567, 1.0
    %v1584 = vadd.f32 %v1568, 1.0
    %v1585 = vadd.f32 %v1569, 1.0
    %v1586 = vadd.f32 %v1570, 1.0
    %v1587 = vadd.f32 %v1571, 1.0
    %v1588 = vadd.f32 %v1572, 1.0
    %v1589 = vadd.f32 %v1573, 1.0
    %v1590 = vadd.f32 %v1574, 1.0
    %v1591 = vadd.f32 %v1575, 1.0
    %v1592 = vadd.f32 %v1576, 1.0
    %v1593 = vadd.f32 %v1577, 1.0
    %v1594 = vadd.f32 %v1578, 1.0
    %v1595 = vadd.f32 %v1579, 1.0
    %v1596 = vadd.f32 %v1580, 1.0
    %1598 = vset.pattern.permute.xlu0 51
    %1599 = vperm.xlu0 %1598, %v695
    %v1600 = vpop.permute.xlu0 %1599
    %1603 = vset.pattern.permute.xlu0 51
    %1604 = vperm.xlu0 %1603, %v700
    %v1605 = vpop.permute.xlu0 %1604
    %1608 = vset.pattern.permute.xlu0 51
    %1609 = vperm.xlu0 %1608, %v705
    %v1610 = vpop.permute.xlu0 %1609
    %1613 = vset.pattern.permute.xlu0 51
    %1614 = vperm.xlu0 %1613, %v710
    %v1615 = vpop.permute.xlu0 %1614
    %1618 = vset.pattern.permute.xlu0 51
    %1619 = vperm.xlu0 %1618, %v715
    %v1620 = vpop.permute.xlu0 %1619
    %1623 = vset.pattern.permute.xlu0 51
    %1624 = vperm.xlu0 %1623, %v720
    %v1625 = vpop.permute.xlu0 %1624
    %1628 = vset.pattern.permute.xlu0 51
    %1629 = vperm.xlu0 %1628, %v725
    %v1630 = vpop.permute.xlu0 %1629
    %1633 = vset.pattern.permute.xlu0 51
    %1634 = vperm.xlu0 %1633, %v730
    %v1635 = vpop.permute.xlu0 %1634
    %1638 = vset.pattern.permute.xlu0 51
    %1639 = vperm.xlu0 %1638, %v735
    %v1640 = vpop.permute.xlu0 %1639
    %1643 = vset.pattern.permute.xlu0 51
    %1644 = vperm.xlu0 %1643, %v740
    %v1645 = vpop.permute.xlu0 %1644
    %1648 = vset.pattern.permute.xlu0 51
    %1649 = vperm.xlu0 %1648, %v745
    %v1650 = vpop.permute.xlu0 %1649
    %1653 = vset.pattern.permute.xlu0 51
    %1654 = vperm.xlu0 %1653, %v750
    %v1655 = vpop.permute.xlu0 %1654
    %1658 = vset.pattern.permute.xlu0 51
    %1659 = vperm.xlu0 %1658, %v755
    %v1660 = vpop.permute.xlu0 %1659
    %1663 = vset.pattern.permute.xlu0 51
    %1664 = vperm.xlu0 %1663, %v760
    %v1665 = vpop.permute.xlu0 %1664
    %1668 = vset.pattern.permute.xlu0 51
    %1669 = vperm.xlu0 %1668, %v765
    %v1670 = vpop.permute.xlu0 %1669
    %1673 = vset.pattern.permute.xlu0 51
    %1674 = vperm.xlu0 %1673, %v770
    %v1675 = vpop.permute.xlu0 %1674
    %v1677 = vlaneseq
    %v1678 = vshrl.u32 %v1677, 7
    %v1679 = vsub.s32 0, %v1678
    %v1680 = vrot.slane %v847, %v1679
    %v1681 = vmul.f32 %v1600, %v1680
    %v1682 = vmul.f32 %v1605, %v1680
    %v1683 = vmul.f32 %v1610, %v1680
    %v1684 = vmul.f32 %v1615, %v1680
    %v1685 = vmul.f32 %v1620, %v1680
    %v1686 = vmul.f32 %v1625, %v1680
    %v1687 = vmul.f32 %v1630, %v1680
    %v1688 = vmul.f32 %v1635, %v1680
    %v1689 = vmul.f32 %v1640, %v1680
    %v1690 = vmul.f32 %v1645, %v1680
    %v1691 = vmul.f32 %v1650, %v1680
    %v1692 = vmul.f32 %v1655, %v1680
    %v1693 = vmul.f32 %v1660, %v1680
    %v1694 = vmul.f32 %v1665, %v1680
    %v1695 = vmul.f32 %v1670, %v1680
    %v1696 = vmul.f32 %v1675, %v1680
    %v1697 = vmul.f32 %v1681, %v1533
    %v1698 = vmul.f32 %v1682, %v1534
    %v1699 = vmul.f32 %v1683, %v1535
    %v1700 = vmul.f32 %v1684, %v1536
    %v1701 = vmul.f32 %v1685, %v1537
    %v1702 = vmul.f32 %v1686, %v1538
    %v1703 = vmul.f32 %v1687, %v1539
    %v1704 = vmul.f32 %v1688, %v1540
    %v1705 = vmul.f32 %v1689, %v1541
    %v1706 = vmul.f32 %v1690, %v1542
    %v1707 = vmul.f32 %v1691, %v1543
    %v1708 = vmul.f32 %v1692, %v1544
    %v1709 = vmul.f32 %v1693, %v1545
    %v1710 = vmul.f32 %v1694, %v1546
    %v1711 = vmul.f32 %v1695, %v1547
    %v1712 = vmul.f32 %v1696, %v1548
    %1713 = vrot.lane.b32.xlu0 %v26, 49
    %v1714 = vpop.permute.xlu0 %1713
    %1715 = vrot.lane.b32.xlu0 %v27, 49
    %v1716 = vpop.permute.xlu0 %1715
    %1717 = vrot.lane.b32.xlu0 %v28, 49
    %v1718 = vpop.permute.xlu0 %1717
    %1719 = vrot.lane.b32.xlu0 %v29, 49
    %v1720 = vpop.permute.xlu0 %1719
    %1721 = vrot.lane.b32.xlu0 %v30, 49
    %v1722 = vpop.permute.xlu0 %1721
    %1723 = vrot.lane.b32.xlu0 %v31, 49
    %v1724 = vpop.permute.xlu0 %1723
    %1725 = vrot.lane.b32.xlu0 %v32, 49
    %v1726 = vpop.permute.xlu0 %1725
    %1727 = vrot.lane.b32.xlu0 %v33, 49
    %v1728 = vpop.permute.xlu0 %1727
    %1729 = vrot.lane.b32.xlu0 %v34, 49
    %v1730 = vpop.permute.xlu0 %1729
    %1731 = vrot.lane.b32.xlu0 %v35, 49
    %v1732 = vpop.permute.xlu0 %1731
    %1733 = vrot.lane.b32.xlu0 %v36, 49
    %v1734 = vpop.permute.xlu0 %1733
    %1735 = vrot.lane.b32.xlu0 %v37, 49
    %v1736 = vpop.permute.xlu0 %1735
    %1737 = vrot.lane.b32.xlu0 %v38, 49
    %v1738 = vpop.permute.xlu0 %1737
    %1739 = vrot.lane.b32.xlu0 %v39, 49
    %v1740 = vpop.permute.xlu0 %1739
    %1741 = vrot.lane.b32.xlu0 %v40, 49
    %v1742 = vpop.permute.xlu0 %1741
    %1743 = vrot.lane.b32.xlu0 %v41, 49
    %v1744 = vpop.permute.xlu0 %1743
    %v1761 = vmul.f32 %v1581, %v1714
    %v1762 = vmul.f32 %v1582, %v1716
    %v1763 = vmul.f32 %v1583, %v1718
    %v1764 = vmul.f32 %v1584, %v1720
    %v1765 = vmul.f32 %v1585, %v1722
    %v1766 = vmul.f32 %v1586, %v1724
    %v1767 = vmul.f32 %v1587, %v1726
    %v1768 = vmul.f32 %v1588, %v1728
    %v1769 = vmul.f32 %v1589, %v1730
    %v1770 = vmul.f32 %v1590, %v1732
    %v1771 = vmul.f32 %v1591, %v1734
    %v1772 = vmul.f32 %v1592, %v1736
    %v1773 = vmul.f32 %v1593, %v1738
    %v1774 = vmul.f32 %v1594, %v1740
    %v1775 = vmul.f32 %v1595, %v1742
    %v1776 = vmul.f32 %v1596, %v1744
    %1793 = vrot.lane.b32.xlu0 %v1761, 127
    %v1794 = vpop.permute.xlu0 %1793
    %1795 = vrot.lane.b32.xlu0 %v1762, 127
    %v1796 = vpop.permute.xlu0 %1795
    %1797 = vrot.lane.b32.xlu0 %v1763, 127
    %v1798 = vpop.permute.xlu0 %1797
    %1799 = vrot.lane.b32.xlu0 %v1764, 127
    %v1800 = vpop.permute.xlu0 %1799
    %1801 = vrot.lane.b32.xlu0 %v1765, 127
    %v1802 = vpop.permute.xlu0 %1801
    %1803 = vrot.lane.b32.xlu0 %v1766, 127
    %v1804 = vpop.permute.xlu0 %1803
    %1805 = vrot.lane.b32.xlu0 %v1767, 127
    %v1806 = vpop.permute.xlu0 %1805
    %1807 = vrot.lane.b32.xlu0 %v1768, 127
    %v1808 = vpop.permute.xlu0 %1807
    %1809 = vrot.lane.b32.xlu0 %v1769, 127
    %v1810 = vpop.permute.xlu0 %1809
    %1811 = vrot.lane.b32.xlu0 %v1770, 127
    %v1812 = vpop.permute.xlu0 %1811
    %1813 = vrot.lane.b32.xlu0 %v1771, 127
    %v1814 = vpop.permute.xlu0 %1813
    %1815 = vrot.lane.b32.xlu0 %v1772, 127
    %v1816 = vpop.permute.xlu0 %1815
    %1817 = vrot.lane.b32.xlu0 %v1773, 127
    %v1818 = vpop.permute.xlu0 %1817
    %1819 = vrot.lane.b32.xlu0 %v1774, 127
    %v1820 = vpop.permute.xlu0 %1819
    %1821 = vrot.lane.b32.xlu0 %v1775, 127
    %v1822 = vpop.permute.xlu0 %1821
    %1823 = vrot.lane.b32.xlu0 %v1776, 127
    %v1824 = vpop.permute.xlu0 %1823
    %v1841 = vadd.f32 %v695, %v1794
    %v1842 = vadd.f32 %v700, %v1796
    %v1843 = vadd.f32 %v705, %v1798
    %v1844 = vadd.f32 %v710, %v1800
    %v1845 = vadd.f32 %v715, %v1802
    %v1846 = vadd.f32 %v720, %v1804
    %v1847 = vadd.f32 %v725, %v1806
    %v1848 = vadd.f32 %v730, %v1808
    %v1849 = vadd.f32 %v735, %v1810
    %v1850 = vadd.f32 %v740, %v1812
    %v1851 = vadd.f32 %v745, %v1814
    %v1852 = vadd.f32 %v750, %v1816
    %v1853 = vadd.f32 %v755, %v1818
    %v1854 = vadd.f32 %v760, %v1820
    %v1855 = vadd.f32 %v765, %v1822
    %v1856 = vadd.f32 %v770, %v1824
    %1857 = vset.pattern.permute.xlu0 2
    %1858 = vperm.xlu0 %1857, %v26
    %v1859 = vpop.permute.xlu0 %1858
    %1861 = vset.pattern.permute.xlu0 2
    %1862 = vperm.xlu0 %1861, %v27
    %v1863 = vpop.permute.xlu0 %1862
    %1865 = vset.pattern.permute.xlu0 2
    %1866 = vperm.xlu0 %1865, %v28
    %v1867 = vpop.permute.xlu0 %1866
    %1869 = vset.pattern.permute.xlu0 2
    %1870 = vperm.xlu0 %1869, %v29
    %v1871 = vpop.permute.xlu0 %1870
    %1873 = vset.pattern.permute.xlu0 2
    %1874 = vperm.xlu0 %1873, %v30
    %v1875 = vpop.permute.xlu0 %1874
    %1877 = vset.pattern.permute.xlu0 2
    %1878 = vperm.xlu0 %1877, %v31
    %v1879 = vpop.permute.xlu0 %1878
    %1881 = vset.pattern.permute.xlu0 2
    %1882 = vperm.xlu0 %1881, %v32
    %v1883 = vpop.permute.xlu0 %1882
    %1885 = vset.pattern.permute.xlu0 2
    %1886 = vperm.xlu0 %1885, %v33
    %v1887 = vpop.permute.xlu0 %1886
    %1889 = vset.pattern.permute.xlu0 2
    %1890 = vperm.xlu0 %1889, %v34
    %v1891 = vpop.permute.xlu0 %1890
    %1893 = vset.pattern.permute.xlu0 2
    %1894 = vperm.xlu0 %1893, %v35
    %v1895 = vpop.permute.xlu0 %1894
    %1897 = vset.pattern.permute.xlu0 2
    %1898 = vperm.xlu0 %1897, %v36
    %v1899 = vpop.permute.xlu0 %1898
    %1901 = vset.pattern.permute.xlu0 2
    %1902 = vperm.xlu0 %1901, %v37
    %v1903 = vpop.permute.xlu0 %1902
    %1905 = vset.pattern.permute.xlu0 2
    %1906 = vperm.xlu0 %1905, %v38
    %v1907 = vpop.permute.xlu0 %1906
    %1909 = vset.pattern.permute.xlu0 2
    %1910 = vperm.xlu0 %1909, %v39
    %v1911 = vpop.permute.xlu0 %1910
    %1913 = vset.pattern.permute.xlu0 2
    %1914 = vperm.xlu0 %1913, %v40
    %v1915 = vpop.permute.xlu0 %1914
    %1917 = vset.pattern.permute.xlu0 2
    %1918 = vperm.xlu0 %1917, %v41
    %v1919 = vpop.permute.xlu0 %1918
    %v1921 = vlaneseq
    %v1922 = vshrl.u32 %v1921, 7
    %v1923 = vsub.s32 2, %v1922
    %v1924 = vrot.slane %v42, %v1923
    %v1925 = vmul.f32 %v1859, %v1924
    %v1926 = vmul.f32 %v1863, %v1924
    %v1927 = vmul.f32 %v1867, %v1924
    %v1928 = vmul.f32 %v1871, %v1924
    %v1929 = vmul.f32 %v1875, %v1924
    %v1930 = vmul.f32 %v1879, %v1924
    %v1931 = vmul.f32 %v1883, %v1924
    %v1932 = vmul.f32 %v1887, %v1924
    %v1933 = vmul.f32 %v1891, %v1924
    %v1934 = vmul.f32 %v1895, %v1924
    %v1935 = vmul.f32 %v1899, %v1924
    %v1936 = vmul.f32 %v1903, %v1924
    %v1937 = vmul.f32 %v1907, %v1924
    %v1938 = vmul.f32 %v1911, %v1924
    %v1939 = vmul.f32 %v1915, %v1924
    %v1940 = vmul.f32 %v1919, %v1924
    %v1941 = vmul.f32 %v1925, %v1697
    %v1942 = vmul.f32 %v1926, %v1698
    %v1943 = vmul.f32 %v1927, %v1699
    %v1944 = vmul.f32 %v1928, %v1700
    %v1945 = vmul.f32 %v1929, %v1701
    %v1946 = vmul.f32 %v1930, %v1702
    %v1947 = vmul.f32 %v1931, %v1703
    %v1948 = vmul.f32 %v1932, %v1704
    %v1949 = vmul.f32 %v1933, %v1705
    %v1950 = vmul.f32 %v1934, %v1706
    %v1951 = vmul.f32 %v1935, %v1707
    %v1952 = vmul.f32 %v1936, %v1708
    %v1953 = vmul.f32 %v1937, %v1709
    %v1954 = vmul.f32 %v1938, %v1710
    %v1955 = vmul.f32 %v1939, %v1711
    %v1956 = vmul.f32 %v1940, %v1712
    %v1957 = vadd.f32 %v1517, %v1941
    %v1958 = vadd.f32 %v1518, %v1942
    %v1959 = vadd.f32 %v1519, %v1943
    %v1960 = vadd.f32 %v1520, %v1944
    %v1961 = vadd.f32 %v1521, %v1945
    %v1962 = vadd.f32 %v1522, %v1946
    %v1963 = vadd.f32 %v1523, %v1947
    %v1964 = vadd.f32 %v1524, %v1948
    %v1965 = vadd.f32 %v1525, %v1949
    %v1966 = vadd.f32 %v1526, %v1950
    %v1967 = vadd.f32 %v1527, %v1951
    %v1968 = vadd.f32 %v1528, %v1952
    %v1969 = vadd.f32 %v1529, %v1953
    %v1970 = vadd.f32 %v1530, %v1954
    %v1971 = vadd.f32 %v1531, %v1955
    %v1972 = vadd.f32 %v1532, %v1956
    %1973 = vst [vmem:[#allocation2] sm:$0xff] %v1957
    %1974 = vst [vmem:[#allocation2 + $0x8] sm:$0xff] %v1958
    %1975 = vst [vmem:[#allocation2 + $0x10] sm:$0xff] %v1959
    %1976 = vst [vmem:[#allocation2 + $0x18] sm:$0xff] %v1960
    %1977 = vst [vmem:[#allocation2 + $0x20] sm:$0xff] %v1961
    %1978 = vst [vmem:[#allocation2 + $0x28] sm:$0xff] %v1962
    %1979 = vst [vmem:[#allocation2 + $0x30] sm:$0xff] %v1963
    %1980 = vst [vmem:[#allocation2 + $0x38] sm:$0xff] %v1964
    %1981 = vst [vmem:[#allocation2 + $0x40] sm:$0xff] %v1965
    %1982 = vst [vmem:[#allocation2 + $0x48] sm:$0xff] %v1966
    %1983 = vst [vmem:[#allocation2 + $0x50] sm:$0xff] %v1967
    %1984 = vst [vmem:[#allocation2 + $0x58] sm:$0xff] %v1968
    %1985 = vst [vmem:[#allocation2 + $0x60] sm:$0xff] %v1969
    %1986 = vst [vmem:[#allocation2 + $0x68] sm:$0xff] %v1970
    %1987 = vst [vmem:[#allocation2 + $0x70] sm:$0xff] %v1971
    %1988 = vst [vmem:[#allocation2 + $0x78] sm:$0xff] %v1972
    %1989 = vst [vmem:[#allocation4] sm:$0xff] %v1517
    %1990 = vst [vmem:[#allocation4 + $0x8] sm:$0xff] %v1518
    %1991 = vst [vmem:[#allocation4 + $0x10] sm:$0xff] %v1519
    %1992 = vst [vmem:[#allocation4 + $0x18] sm:$0xff] %v1520
    %1993 = vst [vmem:[#allocation4 + $0x20] sm:$0xff] %v1521
    %1994 = vst [vmem:[#allocation4 + $0x28] sm:$0xff] %v1522
    %1995 = vst [vmem:[#allocation4 + $0x30] sm:$0xff] %v1523
    %1996 = vst [vmem:[#allocation4 + $0x38] sm:$0xff] %v1524
    %1997 = vst [vmem:[#allocation4 + $0x40] sm:$0xff] %v1525
    %1998 = vst [vmem:[#allocation4 + $0x48] sm:$0xff] %v1526
    %1999 = vst [vmem:[#allocation4 + $0x50] sm:$0xff] %v1527
    %2000 = vst [vmem:[#allocation4 + $0x58] sm:$0xff] %v1528
    %2001 = vst [vmem:[#allocation4 + $0x60] sm:$0xff] %v1529
    %2002 = vst [vmem:[#allocation4 + $0x68] sm:$0xff] %v1530
    %2003 = vst [vmem:[#allocation4 + $0x70] sm:$0xff] %v1531
    %2004 = vst [vmem:[#allocation4 + $0x78] sm:$0xff] %v1532
    %2005 = vst [vmem:[#allocation6] sm:$0xff] %v1697
    %2006 = vst [vmem:[#allocation6 + $0x8] sm:$0xff] %v1698
    %2007 = vst [vmem:[#allocation6 + $0x10] sm:$0xff] %v1699
    %2008 = vst [vmem:[#allocation6 + $0x18] sm:$0xff] %v1700
    %2009 = vst [vmem:[#allocation6 + $0x20] sm:$0xff] %v1701
    %2010 = vst [vmem:[#allocation6 + $0x28] sm:$0xff] %v1702
    %2011 = vst [vmem:[#allocation6 + $0x30] sm:$0xff] %v1703
    %2012 = vst [vmem:[#allocation6 + $0x38] sm:$0xff] %v1704
    %2013 = vst [vmem:[#allocation6 + $0x40] sm:$0xff] %v1705
    %2014 = vst [vmem:[#allocation6 + $0x48] sm:$0xff] %v1706
    %2015 = vst [vmem:[#allocation6 + $0x50] sm:$0xff] %v1707
    %2016 = vst [vmem:[#allocation6 + $0x58] sm:$0xff] %v1708
    %2017 = vst [vmem:[#allocation6 + $0x60] sm:$0xff] %v1709
    %2018 = vst [vmem:[#allocation6 + $0x68] sm:$0xff] %v1710
    %2019 = vst [vmem:[#allocation6 + $0x70] sm:$0xff] %v1711
    %2020 = vst [vmem:[#allocation6 + $0x78] sm:$0xff] %v1712
    %2037 = vrot.lane.b32.xlu0 %v1841, 78
    %v2038 = vpop.permute.xlu0 %2037
    %2039 = vrot.lane.b32.xlu0 %v1842, 78
    %v2040 = vpop.permute.xlu0 %2039
    %2041 = vrot.lane.b32.xlu0 %v1843, 78
    %v2042 = vpop.permute.xlu0 %2041
    %2043 = vrot.lane.b32.xlu0 %v1844, 78
    %v2044 = vpop.permute.xlu0 %2043
    %2045 = vrot.lane.b32.xlu0 %v1845, 78
    %v2046 = vpop.permute.xlu0 %2045
    %2047 = vrot.lane.b32.xlu0 %v1846, 78
    %v2048 = vpop.permute.xlu0 %2047
    %2049 = vrot.lane.b32.xlu0 %v1847, 78
    %v2050 = vpop.permute.xlu0 %2049
    %2051 = vrot.lane.b32.xlu0 %v1848, 78
    %v2052 = vpop.permute.xlu0 %2051
    %2053 = vrot.lane.b32.xlu0 %v1849, 78
    %v2054 = vpop.permute.xlu0 %2053
    %2055 = vrot.lane.b32.xlu0 %v1850, 78
    %v2056 = vpop.permute.xlu0 %2055
    %2057 = vrot.lane.b32.xlu0 %v1851, 78
    %v2058 = vpop.permute.xlu0 %2057
    %2059 = vrot.lane.b32.xlu0 %v1852, 78
    %v2060 = vpop.permute.xlu0 %2059
    %2061 = vrot.lane.b32.xlu0 %v1853, 78
    %v2062 = vpop.permute.xlu0 %2061
    %2063 = vrot.lane.b32.xlu0 %v1854, 78
    %v2064 = vpop.permute.xlu0 %2063
    %2065 = vrot.lane.b32.xlu0 %v1855, 78
    %v2066 = vpop.permute.xlu0 %2065
    %2067 = vrot.lane.b32.xlu0 %v1856, 78
    %v2068 = vpop.permute.xlu0 %2067
    %2085 = vrot.lane.b32.xlu0 %v695, 79
    %v2086 = vpop.permute.xlu0 %2085
    %2087 = vrot.lane.b32.xlu0 %v700, 79
    %v2088 = vpop.permute.xlu0 %2087
    %2089 = vrot.lane.b32.xlu0 %v705, 79
    %v2090 = vpop.permute.xlu0 %2089
    %2091 = vrot.lane.b32.xlu0 %v710, 79
    %v2092 = vpop.permute.xlu0 %2091
    %2093 = vrot.lane.b32.xlu0 %v715, 79
    %v2094 = vpop.permute.xlu0 %2093
    %2095 = vrot.lane.b32.xlu0 %v720, 79
    %v2096 = vpop.permute.xlu0 %2095
    %2097 = vrot.lane.b32.xlu0 %v725, 79
    %v2098 = vpop.permute.xlu0 %2097
    %2099 = vrot.lane.b32.xlu0 %v730, 79
    %v2100 = vpop.permute.xlu0 %2099
    %2101 = vrot.lane.b32.xlu0 %v735, 79
    %v2102 = vpop.permute.xlu0 %2101
    %2103 = vrot.lane.b32.xlu0 %v740, 79
    %v2104 = vpop.permute.xlu0 %2103
    %2105 = vrot.lane.b32.xlu0 %v745, 79
    %v2106 = vpop.permute.xlu0 %2105
    %2107 = vrot.lane.b32.xlu0 %v750, 79
    %v2108 = vpop.permute.xlu0 %2107
    %2109 = vrot.lane.b32.xlu0 %v755, 79
    %v2110 = vpop.permute.xlu0 %2109
    %2111 = vrot.lane.b32.xlu0 %v760, 79
    %v2112 = vpop.permute.xlu0 %2111
    %2113 = vrot.lane.b32.xlu0 %v765, 79
    %v2114 = vpop.permute.xlu0 %2113
    %2115 = vrot.lane.b32.xlu0 %v770, 79
    %v2116 = vpop.permute.xlu0 %2115
    %2149 = vrot.lane.b32.xlu0 %v1581, 79
    %v2150 = vpop.permute.xlu0 %2149
    %2151 = vrot.lane.b32.xlu0 %v1582, 79
    %v2152 = vpop.permute.xlu0 %2151
    %2153 = vrot.lane.b32.xlu0 %v1583, 79
    %v2154 = vpop.permute.xlu0 %2153
    %2155 = vrot.lane.b32.xlu0 %v1584, 79
    %v2156 = vpop.permute.xlu0 %2155
    %2157 = vrot.lane.b32.xlu0 %v1585, 79
    %v2158 = vpop.permute.xlu0 %2157
    %2159 = vrot.lane.b32.xlu0 %v1586, 79
    %v2160 = vpop.permute.xlu0 %2159
    %2161 = vrot.lane.b32.xlu0 %v1587, 79
    %v2162 = vpop.permute.xlu0 %2161
    %2163 = vrot.lane.b32.xlu0 %v1588, 79
    %v2164 = vpop.permute.xlu0 %2163
    %2165 = vrot.lane.b32.xlu0 %v1589, 79
    %v2166 = vpop.permute.xlu0 %2165
    %2167 = vrot.lane.b32.xlu0 %v1590, 79
    %v2168 = vpop.permute.xlu0 %2167
    %2169 = vrot.lane.b32.xlu0 %v1591, 79
    %v2170 = vpop.permute.xlu0 %2169
    %2171 = vrot.lane.b32.xlu0 %v1592, 79
    %v2172 = vpop.permute.xlu0 %2171
    %2173 = vrot.lane.b32.xlu0 %v1593, 79
    %v2174 = vpop.permute.xlu0 %2173
    %2175 = vrot.lane.b32.xlu0 %v1594, 79
    %v2176 = vpop.permute.xlu0 %2175
    %2177 = vrot.lane.b32.xlu0 %v1595, 79
    %v2178 = vpop.permute.xlu0 %2177
    %2179 = vrot.lane.b32.xlu0 %v1596, 79
    %v2180 = vpop.permute.xlu0 %2179
    %vm2197 = vcmask 7168
    %v2198 = vsel %vm2197, %v2038, %v2086
    %v2199 = vsel %vm2197, %v2040, %v2088
    %v2200 = vsel %vm2197, %v2042, %v2090
    %v2201 = vsel %vm2197, %v2044, %v2092
    %v2202 = vsel %vm2197, %v2046, %v2094
    %v2203 = vsel %vm2197, %v2048, %v2096
    %v2204 = vsel %vm2197, %v2050, %v2098
    %v2205 = vsel %vm2197, %v2052, %v2100
    %v2206 = vsel %vm2197, %v2054, %v2102
    %v2207 = vsel %vm2197, %v2056, %v2104
    %v2208 = vsel %vm2197, %v2058, %v2106
    %v2209 = vsel %vm2197, %v2060, %v2108
    %v2210 = vsel %vm2197, %v2062, %v2110
    %v2211 = vsel %vm2197, %v2064, %v2112
    %v2212 = vsel %vm2197, %v2066, %v2114
    %v2213 = vsel %vm2197, %v2068, %v2116
    %vm2214 = vcmask 15360
    %v2215 = vsel %vm2214, %v2198, %v2150
    %v2216 = vsel %vm2214, %v2199, %v2152
    %v2217 = vsel %vm2214, %v2200, %v2154
    %v2218 = vsel %vm2214, %v2201, %v2156
    %v2219 = vsel %vm2214, %v2202, %v2158
    %v2220 = vsel %vm2214, %v2203, %v2160
    %v2221 = vsel %vm2214, %v2204, %v2162
    %v2222 = vsel %vm2214, %v2205, %v2164
    %v2223 = vsel %vm2214, %v2206, %v2166
    %v2224 = vsel %vm2214, %v2207, %v2168
    %v2225 = vsel %vm2214, %v2208, %v2170
    %v2226 = vsel %vm2214, %v2209, %v2172
    %v2227 = vsel %vm2214, %v2210, %v2174
    %v2228 = vsel %vm2214, %v2211, %v2176
    %v2229 = vsel %vm2214, %v2212, %v2178
    %v2230 = vsel %vm2214, %v2213, %v2180
    %vm2231 = vcmask 23552
    %v2232 = vsel %vm2231, %v2215, 0.0
    %v2233 = vsel %vm2231, %v2216, 0.0
    %v2234 = vsel %vm2231, %v2217, 0.0
    %v2235 = vsel %vm2231, %v2218, 0.0
    %v2236 = vsel %vm2231, %v2219, 0.0
    %v2237 = vsel %vm2231, %v2220, 0.0
    %v2238 = vsel %vm2231, %v2221, 0.0
    %v2239 = vsel %vm2231, %v2222, 0.0
    %v2240 = vsel %vm2231, %v2223, 0.0
    %v2241 = vsel %vm2231, %v2224, 0.0
    %v2242 = vsel %vm2231, %v2225, 0.0
    %v2243 = vsel %vm2231, %v2226, 0.0
    %v2244 = vsel %vm2231, %v2227, 0.0
    %v2245 = vsel %vm2231, %v2228, 0.0
    %v2246 = vsel %vm2231, %v2229, 0.0
    %v2247 = vsel %vm2231, %v2230, 0.0
    %vm2248 = vcmask 64512
    %2249 = vst.msk [vmem:[%s5] sm:$0xff] %vm2248, %v2232
    %2250 = vst.msk [vmem:[%s5 + $0x8] sm:$0xff] %vm2248, %v2233
    %2251 = vst.msk [vmem:[%s5 + $0x10] sm:$0xff] %vm2248, %v2234
    %2252 = vst.msk [vmem:[%s5 + $0x18] sm:$0xff] %vm2248, %v2235
    %2253 = vst.msk [vmem:[%s5 + $0x20] sm:$0xff] %vm2248, %v2236
    %2254 = vst.msk [vmem:[%s5 + $0x28] sm:$0xff] %vm2248, %v2237
    %2255 = vst.msk [vmem:[%s5 + $0x30] sm:$0xff] %vm2248, %v2238
    %2256 = vst.msk [vmem:[%s5 + $0x38] sm:$0xff] %vm2248, %v2239
    %2257 = vst.msk [vmem:[%s5 + $0x40] sm:$0xff] %vm2248, %v2240
    %2258 = vst.msk [vmem:[%s5 + $0x48] sm:$0xff] %vm2248, %v2241
    %2259 = vst.msk [vmem:[%s5 + $0x50] sm:$0xff] %vm2248, %v2242
    %2260 = vst.msk [vmem:[%s5 + $0x58] sm:$0xff] %vm2248, %v2243
    %2261 = vst.msk [vmem:[%s5 + $0x60] sm:$0xff] %vm2248, %v2244
    %2262 = vst.msk [vmem:[%s5 + $0x68] sm:$0xff] %vm2248, %v2245
    %2263 = vst.msk [vmem:[%s5 + $0x70] sm:$0xff] %vm2248, %v2246
    %2264 = vst.msk [vmem:[%s5 + $0x78] sm:$0xff] %vm2248, %v2247
    // Predicated region
    $region22: #{tpu_custom_call.1} parent=1 // pred_check
      _
    $region23: #{tpu_custom_call.1} parent=1 // pred_check_branch
      %2266 = sbr.rel (0) target = $region25
    $region24: #{tpu_custom_call.1} parent=1 // pred_region
      _
    $region25: #{tpu_custom_call.1} parent=1 // pred_fallthru
      _
    // Predicated region
    $region26: #{tpu_custom_call.1} parent=1 // pred_check
      _
    $region27: #{tpu_custom_call.1} parent=1 // pred_check_branch
      %2268 = sbr.rel (0) target = $region29
    $region28: #{tpu_custom_call.1} parent=1 // pred_region
      %s2270 = ssub.s32 2048, 2048
      %2271 = vsyncadd [#allocation3], %s2270
      %s2272 = sshll.u32 [#allocation2], 4
      %s2273 = int_to_ptr.vmem [resolvable:$true] %s2272
      %2278 = dma.vmem_to_hbm [thread:$0]  %s2273, 2048, %s6, [#allocation3], 128, 128, 8
    $region29: #{tpu_custom_call.1} parent=1 // pred_fallthru
      _
    // Predicated region
    $region30: #{tpu_custom_call.1} parent=1 // pred_check
      _
    $region31: #{tpu_custom_call.1} parent=1 // pred_check_branch
      %2280 = sbr.rel (0) target = $region33
    $region32: #{tpu_custom_call.1} parent=1 // pred_region
      %s2282 = ssub.s32 2048, 2048
      %2283 = vsyncadd [#allocation5], %s2282
      %s2284 = sshll.u32 [#allocation4], 4
      %s2285 = int_to_ptr.vmem [resolvable:$true] %s2284
      %2290 = dma.vmem_to_hbm [thread:$0]  %s2285, 2048, %s7, [#allocation5], 128, 128, 8
    $region33: #{tpu_custom_call.1} parent=1 // pred_fallthru
      _
    // Predicated region
    $region34: #{tpu_custom_call.1} parent=1 // pred_check
      _
    $region35: #{tpu_custom_call.1} parent=1 // pred_check_branch
      %2292 = sbr.rel (0) target = $region37
    $region36: #{tpu_custom_call.1} parent=1 // pred_region
      %s2294 = ssub.s32 2048, 2048
      %2295 = vsyncadd [#allocation5], %s2294
      %s2296 = sshll.u32 [#allocation6], 4
      %s2297 = int_to_ptr.vmem [resolvable:$true] %s2296
      %2302 = dma.vmem_to_hbm [thread:$0]  %s2297, 2048, %s8, [#allocation5], 128, 128, 8
    $region37: #{tpu_custom_call.1} parent=1 // pred_fallthru
      _
    // Predicated region
    $region38: #{tpu_custom_call.1} parent=1 // pred_check
      _
    $region39: #{tpu_custom_call.1} parent=1 // pred_check_branch
      %2304 = sbr.rel (0) target = $region41
    $region40: #{tpu_custom_call.1} parent=1 // pred_region
      _
    $region41: #{tpu_custom_call.1} parent=1 // pred_fallthru
      _
    // Predicated region
    $region42: #{tpu_custom_call.1} parent=1 // pred_check
      _
    $region43: #{tpu_custom_call.1} parent=1 // pred_check_branch
      %2306 = sbr.rel (0) target = $region45
    $region44: #{tpu_custom_call.1} parent=1 // pred_region
      %2307 = dma.done [#allocation3], 2048
    $region45: #{tpu_custom_call.1} parent=1 // pred_fallthru
      _
    // Predicated region
    $region46: #{tpu_custom_call.1} parent=1 // pred_check
      _
    $region47: #{tpu_custom_call.1} parent=1 // pred_check_branch
      %2309 = sbr.rel (0) target = $region49
    $region48: #{tpu_custom_call.1} parent=1 // pred_region
      %2310 = dma.done [#allocation5], 2048
    $region49: #{tpu_custom_call.1} parent=1 // pred_fallthru
      _
    // Predicated region
    $region50: #{tpu_custom_call.1} parent=1 // pred_check
      _
    $region51: #{tpu_custom_call.1} parent=1 // pred_check_branch
      %2312 = sbr.rel (0) target = $region53
    $region52: #{tpu_custom_call.1} parent=1 // pred_region
      %2313 = dma.done [#allocation5], 2048
    $region53: #{tpu_custom_call.1} parent=1 // pred_fallthru
      _
    %2314 = vsyncpa [#allocation3], 1
    %2315 = vsyncpa [#allocation5], 1

</llo_original>
